<compile_context>
chip_gen: v5e
topology: v5e:2x2
jax: 0.10.0
libtpu: 0.0.40
codegen_flags: <defaults>
</compile_context>

<pallas_src>
import functools

import jax
import jax.numpy as jnp
from jax.experimental import pallas as pl
from jax.experimental.pallas import tpu as pltpu


# ----------------------------------------------------------------------------
# Kernel
# ----------------------------------------------------------------------------
def lstm_chunk_kernel(x_ref, wih_ref, whh_ref, b_ref, wfc_ref, bfc_ref,
                      out_ref, gx_sc, h_sc, c_sc, *, seq_len, mask_tail):
    """One (batch-block, time-chunk) grid step.

    x_ref:   (T_BLOCK, B_blk, I)   time-major input chunk (streamed, mm dtype)
    wih_ref: (I,  Gp)              W_ih^T, gate-laid-out (mm dtype)
    whh_ref: (Hs, Gp)              W_hh^T, gate-laid-out (mm dtype)
    b_ref:   (1,  Gp)              b_ih + b_hh (f32)
    wfc_ref: (Hs, 1)               fc weight^T, zero-padded rows (f32)
    bfc_ref: (1, 1)                fc bias (f32)
    out_ref: (B_blk, 1)            final prediction (written on last chunk)
    gx_sc:   (T_BLOCK, B_blk, Gp)  staged x@W_ih + bias (f32)
    h_sc/c_sc: (B_blk, Hs)         recurrent carries (f32), persist across chunks
    """
    T_blk, B_blk, I_dim = x_ref.shape
    Hs = whh_ref.shape[0]
    Gp = whh_ref.shape[1]
    t_idx = pl.program_id(1)

    @pl.when(t_idx == 0)
    def _init():
        h_sc[...] = jnp.zeros_like(h_sc)
        c_sc[...] = jnp.zeros_like(c_sc)

    # Hoisted input projection: one (T_blk*B_blk, I) x (I, Gp) MXU matmul for the
    # whole chunk (M >= 256 rows by construction); bias folded into the store.
    # x is time-major so both reshapes are relayout-free (B_blk % 8 == 0).
    x_flat = x_ref[...].reshape(T_blk * B_blk, I_dim)
    gx = jnp.dot(x_flat, wih_ref[...], preferred_element_type=jnp.float32)
    gx_sc[...] = gx.reshape(T_blk, B_blk, Gp) + b_ref[...]

    whh = whh_ref[...]                      # VMEM-resident recurrent weight

    def step(t, carry):
        h, c = carry
        gates = gx_sc[t] + jnp.dot(h.astype(whh.dtype), whh,
                                   preferred_element_type=jnp.float32)
        i_g = jax.nn.sigmoid(gates[:, 0 * Hs:1 * Hs])
        f_g = jax.nn.sigmoid(gates[:, 1 * Hs:2 * Hs])
        g_g = jnp.tanh(gates[:, 2 * Hs:3 * Hs])
        o_g = jax.nn.sigmoid(gates[:, 3 * Hs:4 * Hs])
        c_new = f_g * c + i_g * g_g
        h_new = o_g * jnp.tanh(c_new)
        if mask_tail:  # static flag: only emitted when T was padded up
            valid = (t_idx * T_blk + t) < seq_len
            h_new = jnp.where(valid, h_new, h)
            c_new = jnp.where(valid, c_new, c)
        return h_new, c_new

    # Partial unroll: overlaps step t's h@W_hh with step t-1's sigmoid/tanh while
    # bounding vreg pressure and code size.
    h, c = jax.lax.fori_loop(0, T_blk, step, (h_sc[...], c_sc[...]),
                             unroll=min(8, T_blk))
    h_sc[...] = h
    c_sc[...] = c

    # Fused fc(H, 1) on the final hidden state (out[:, -1, :] of the LSTM).
    @pl.when(t_idx == pl.num_programs(1) - 1)
    def _finish():
        out_ref[...] = (jnp.dot(h, wfc_ref[...],
                                preferred_element_type=jnp.float32)
                        + bfc_ref[...])


# ----------------------------------------------------------------------------
# Wrapper helpers
# ----------------------------------------------------------------------------
def _round_up(n, m):
    return ((n + m - 1) // m) * m


def _num_tensorcores():
    """2 on v7x-class chips (megacore split helps), 1 on v5e/v6e."""
    try:
        kind = jax.devices()[0].device_kind.lower()
    except Exception:
        return 1
    return 2 if "v7" in kind else 1


def _vmem_limit_bytes():
    """~3/4 of physical VMEM, capped: ~96 MiB on v5e/v6e, ~48 MiB on v7x."""
    cap = None
    try:
        cap = getattr(pltpu.get_tpu_info(), "vmem_capacity_bytes", None)
    except Exception:
        cap = None
    if not cap:
        cap = 64 * 1024 * 1024          # conservative (v7x-sized) fallback
    return int(min(100 * 1024 * 1024, cap * 3 // 4))


def _pick_t_block(T, B_blk, Gp, sub):
    """Timesteps per chunk: multiple of `sub`, big enough that the projection
    matmul has >= 256 rows, capped by a ~4 MiB gx-scratch budget and by T."""
    target_rows = 256
    tb = _round_up(-(-target_rows // B_blk), sub)
    budget = 4 * 1024 * 1024
    vmem_cap = max(sub, ((budget // (B_blk * Gp * 4)) // sub) * sub)
    tb = min(tb, vmem_cap, 128)
    tb = min(tb, _round_up(T, sub))
    return max(sub, tb)


# ----------------------------------------------------------------------------
# Forward pass
# ----------------------------------------------------------------------------
def lstm_model_forward(x, params, *, matmul_dtype=jnp.float32):
    """x: (B, T, I) float32, batch_first like the PyTorch module. Returns (B, 1)."""
    w_ih, w_hh = params["w_ih"], params["w_hh"]          # (4H, I), (4H, H)
    b_ih, b_hh = params["b_ih"], params["b_hh"]          # (4H,), (4H,)
    w_fc, b_fc = params["w_fc"], params["b_fc"]          # (1, H), (1,)

    B, T, I = x.shape
    H = w_hh.shape[1]
    f32 = jnp.float32
    mm = jnp.dtype(matmul_dtype)

    # --- gate layout: compact when all four gates fit one 128-lane tile,
    #     otherwise one aligned 128-lane band per gate ------------------------
    if 4 * H <= 128:
        Hs = H                      # gate stride (lane offset between gates)
        Gp = 128                    # padded gate width
    else:
        Hs = _round_up(H, 128)
        Gp = 4 * Hs

    def layout_gate_cols(w_t):      # (K, 4H) -> (K, Gp); gate g at [g*Hs, g*Hs+H)
        K = w_t.shape[0]
        out = jnp.zeros((K, Gp), f32)
        for g in range(4):
            out = out.at[:, g * Hs:g * Hs + H].set(w_t[:, g * H:(g + 1) * H])
        return out

    # Padded-lane invariant: zero weight rows/cols + zero bias in the pad lanes
    # keep c_pad = 0 and h_pad = 0 through the whole recurrence, and zero-padded
    # W_hh / W_fc rows prevent any contamination of real lanes.
    wih_p = layout_gate_cols(jnp.asarray(w_ih, f32).T).astype(mm)          # (I, Gp)
    whh_t = jnp.zeros((Hs, 4 * H), f32).at[:H, :].set(jnp.asarray(w_hh, f32).T)
    whh_p = layout_gate_cols(whh_t).astype(mm)                             # (Hs, Gp)
    bias_p = layout_gate_cols((b_ih + b_hh).astype(f32).reshape(1, 4 * H)) # (1, Gp)
    wfc_p = jnp.zeros((Hs, 1), f32).at[:H, :].set(jnp.asarray(w_fc, f32).T)
    bfc_p = jnp.asarray(b_fc, f32).reshape(1, 1)

    # --- batch / time padding and tiling -------------------------------------
    B_pad = _round_up(max(B, 8), 8)               # fill sublane tiles
    n_b = 2 if (_num_tensorcores() >= 2 and B_pad % 16 == 0) else 1
    B_blk = B_pad // n_b

    sub = 16 if mm == jnp.dtype(jnp.bfloat16) else 8
    T_BLOCK = _pick_t_block(T, B_blk, Gp, sub)
    T_pad = _round_up(T, T_BLOCK)
    n_t = T_pad // T_BLOCK

    # Time-major, padded input (T_pad, B_pad, I).  The one-off wrapper transpose
    # costs a single pass over x (the smallest tensor) and keeps every in-kernel
    # reshape relayout-free while gx is staged time-major.
    x_p = jnp.transpose(jnp.asarray(x, f32), (1, 0, 2))
    if (B_pad, T_pad) != (B, T):
        x_p = jnp.pad(x_p, ((0, T_pad - T), (0, B_pad - B), (0, 0)))
    x_p = x_p.astype(mm)

    kernel = functools.partial(lstm_chunk_kernel,
                               seq_len=T, mask_tail=(T_pad != T))

    def weight_spec(shape, single_buffer):
        # Constant block index -> weights stay VMEM-resident; single-buffer them
        # so they are not pointlessly double-buffered.
        if single_buffer:
            return pl.BlockSpec(shape, lambda b, t: (0, 0),
                                pipeline_mode=pl.Buffered(1))
        return pl.BlockSpec(shape, lambda b, t: (0, 0))

    def call(single_buffer_weights):
        return pl.pallas_call(
            kernel,
            out_shape=jax.ShapeDtypeStruct((B_pad, 1), f32),
            grid=(n_b, n_t),
            in_specs=[
                # streamed time-major x chunk (double-buffered by the pipeline)
                pl.BlockSpec((T_BLOCK, B_blk, I), lambda b, t: (t, b, 0)),
                weight_spec((I, Gp), single_buffer_weights),
                weight_spec((Hs, Gp), single_buffer_weights),
                weight_spec((1, Gp), single_buffer_weights),
                weight_spec((Hs, 1), single_buffer_weights),
                weight_spec((1, 1), single_buffer_weights),
            ],
            out_specs=pl.BlockSpec((B_blk, 1), lambda b, t: (b, 0)),
            scratch_shapes=[
                pltpu.VMEM((T_BLOCK, B_blk, Gp), f32),   # staged x@W_ih + bias
                pltpu.VMEM((B_blk, Hs), f32),            # h carry
                pltpu.VMEM((B_blk, Hs), f32),            # c carry
            ],
            compiler_params=pltpu.CompilerParams(
                dimension_semantics=("parallel", "arbitrary"),
                vmem_limit_bytes=_vmem_limit_bytes(),
            ),
        )(x_p, wih_p, whh_p, bias_p, wfc_p, bfc_p)

    try:
        out_p = call(True)
    except Exception:
        # Fallback if pl.Buffered(1) single-buffered weights are rejected by
        # this JAX/Mosaic version (semantically identical, just double-buffered).
        out_p = call(False)

    return out_p[:B]


# ----------------------------------------------------------------------------
# Pure-JAX reference (torch.nn.LSTM + nn.Linear semantics) and init
# ----------------------------------------------------------------------------
def reference_forward(x, params):
    w_ih, w_hh = params["w_ih"], params["w_hh"]
    b_ih, b_hh = params["b_ih"], params["b_hh"]
    w_fc, b_fc = params["w_fc"], params["b_fc"]
    hp = jax.lax.Precision.HIGHEST
    B, T, _ = x.shape
    H = w_hh.shape[1]
    h = jnp.zeros((B, H), jnp.float32)
    c = jnp.zeros((B, H), jnp.float32)
    for t in range(T):
        x_t = x[:, t, :]
        gates = (jnp.dot(x_t, w_ih.T, precision=hp)
                 + jnp.dot(h, w_hh.T, precision=hp) + b_ih + b_hh)
        i_g = jax.nn.sigmoid(gates[:, 0 * H:1 * H])
        f_g = jax.nn.sigmoid(gates[:, 1 * H:2 * H])
        g_g = jnp.tanh(gates[:, 2 * H:3 * H])
        o_g = jax.nn.sigmoid(gates[:, 3 * H:4 * H])
        c = f_g * c + i_g * g_g
        h = o_g * jnp.tanh(c)
    return jnp.dot(h, w_fc.T, precision=hp) + b_fc


def init_params(key, input_size, hidden_size):
    """Deterministic init mimicking PyTorch uniform(-1/sqrt(H), 1/sqrt(H))."""
    k = 1.0 / jnp.sqrt(jnp.float32(hidden_size))
    ks = jax.random.split(key, 6)
    H, I = hidden_size, input_size
    return {
        "w_ih": jax.random.uniform(ks[0], (4 * H, I), jnp.float32, -k, k),
        "w_hh": jax.random.uniform(ks[1], (4 * H, H), jnp.float32, -k, k),
        "b_ih": jax.random.uniform(ks[2], (4 * H,), jnp.float32, -k, k),
        "b_hh": jax.random.uniform(ks[3], (4 * H,), jnp.float32, -k, k),
        "w_fc": jax.random.uniform(ks[4], (1, H), jnp.float32, -k, k),
        "b_fc": jax.random.uniform(ks[5], (1,), jnp.float32, -k, k),
    }


if __name__ == "__main__":
    B, T, I, H = 2, 8, 16, 32  # batch, seq, input_size, hidden_size

    key = jax.random.PRNGKey(0)
    k_x, k_p = jax.random.split(key)
    x = jax.random.normal(k_x, (B, T, I), jnp.float32)
    params = init_params(k_p, I, H)

    ref = reference_forward(x, params)

    # f32 matmuls (default): tight parity with the PyTorch module.
    out = jax.block_until_ready(lstm_model_forward(x, params))
    assert out.shape == (B, 1), out.shape
    assert jnp.allclose(out, ref, atol=1e-3, rtol=1e-3), (out, ref)

    # bf16 matmuls with f32 accumulation (review item): looser tolerance.
    out_bf16 = jax.block_until_ready(
        lstm_model_forward(x, params, matmul_dtype=jnp.bfloat16))
    assert out_bf16.shape == (B, 1), out_bf16.shape
    assert jnp.allclose(out_bf16, ref, atol=5e-2, rtol=5e-2), (out_bf16, ref)

    print("KERNEL_OK")
</pallas_src>

<mosaic_0001>
module attributes {stable_mosaic.version = 11 : i64} {
  func.func @lstm_chunk_kernel(%arg0: i32, %arg1: i32, %arg2: memref<8x8x16xf32, #tpu.memory_space<vmem>>, %arg3: memref<16x128xf32, #tpu.memory_space<vmem>>, %arg4: memref<32x128xf32, #tpu.memory_space<vmem>>, %arg5: memref<1x128xf32, #tpu.memory_space<vmem>>, %arg6: memref<32x1xf32, #tpu.memory_space<vmem>>, %arg7: memref<1x1xf32, #tpu.memory_space<vmem>>, %arg8: memref<8x1xf32, #tpu.memory_space<vmem>>, %arg9: memref<8x8x128xf32, #tpu.memory_space<vmem>>, %arg10: memref<8x32xf32, #tpu.memory_space<vmem>>, %arg11: memref<8x32xf32, #tpu.memory_space<vmem>>) attributes {dimension_semantics = [#tpu.dimension_semantics<parallel>, #tpu.dimension_semantics<arbitrary>], iteration_bounds = array<i64: 1, 1>, scalar_prefetch = 0 : i64, scratch_operands = 3 : i64, tpu.core_type = #tpu.core_type<tc>, window_params = [{transform_indices = @transform_0, window_bounds = array<i64: 8, 8, 16>}, {pipeline_mode = #tpu.pipeline_mode<synchronous>, transform_indices = @transform_1, window_bounds = array<i64: 16, 128>}, {pipeline_mode = #tpu.pipeline_mode<synchronous>, transform_indices = @transform_2, window_bounds = array<i64: 32, 128>}, {pipeline_mode = #tpu.pipeline_mode<synchronous>, transform_indices = @transform_3, window_bounds = array<i64: 1, 128>}, {pipeline_mode = #tpu.pipeline_mode<synchronous>, transform_indices = @transform_4, window_bounds = array<i64: 32, 1>}, {pipeline_mode = #tpu.pipeline_mode<synchronous>, transform_indices = @transform_5, window_bounds = array<i64: 1, 1>}, {transform_indices = @transform_6, window_bounds = array<i64: 8, 1>}]} {
    %c0_i32 = arith.constant 0 : i32
    %0 = arith.cmpi eq, %arg1, %c0_i32 : i32
    %1 = arith.extui %0 : i1 to i32
    %c0_i32_0 = arith.constant 0 : i32
    %2 = arith.cmpi ne, %1, %c0_i32_0 : i32
    scf.if %2 {
      %cst_71 = arith.constant 0.000000e+00 : f32
      %261 = vector.broadcast %cst_71 : f32 to vector<8x32xf32>
      %c0_72 = arith.constant 0 : index
      %c0_73 = arith.constant 0 : index
      %262 = vector.load %arg10[%c0_72, %c0_73] : memref<8x32xf32, #tpu.memory_space<vmem>>, vector<8x32xf32>
      tpu.vector_store %arg10[%c0_72, %c0_73], %261 {strides = array<i32>} : memref<8x32xf32, #tpu.memory_space<vmem>>, vector<8x32xf32>,
      %cst_74 = arith.constant 0.000000e+00 : f32
      %263 = vector.broadcast %cst_74 : f32 to vector<8x32xf32>
      %c0_75 = arith.constant 0 : index
      %c0_76 = arith.constant 0 : index
      %264 = vector.load %arg11[%c0_75, %c0_76] : memref<8x32xf32, #tpu.memory_space<vmem>>, vector<8x32xf32>
      tpu.vector_store %arg11[%c0_75, %c0_76], %263 {strides = array<i32>} : memref<8x32xf32, #tpu.memory_space<vmem>>, vector<8x32xf32>,
    } else {
    }
    %c0 = arith.constant 0 : index
    %c0_1 = arith.constant 0 : index
    %c0_2 = arith.constant 0 : index
    %3 = vector.load %arg2[%c0, %c0_1, %c0_2] : memref<8x8x16xf32, #tpu.memory_space<vmem>>, vector<8x8x16xf32>
    %4 = vector.shape_cast %3 : vector<8x8x16xf32> to vector<64x16xf32>
    %c0_3 = arith.constant 0 : index
    %c0_4 = arith.constant 0 : index
    %5 = vector.load %arg3[%c0_3, %c0_4] : memref<16x128xf32, #tpu.memory_space<vmem>>, vector<16x128xf32>
    %cst = arith.constant dense<0.000000e+00> : vector<64x128xf32>
    %6 = tpu.matmul %4, %5, %cst {dimension_numbers = #tpu.dot_dimension_numbers<[1], [0], [0], [1], [0, 0, 1, 1], [], []>} : vector<64x16xf32>, vector<16x128xf32>, vector<64x128xf32> -> vector<64x128xf32>
    %7 = vector.shape_cast %6 : vector<64x128xf32> to vector<8x8x128xf32>
    %c0_5 = arith.constant 0 : index
    %c0_6 = arith.constant 0 : index
    %8 = vector.load %arg5[%c0_5, %c0_6] : memref<1x128xf32, #tpu.memory_space<vmem>>, vector<1x128xf32>
    %9 = vector.shape_cast %8 : vector<1x128xf32> to vector<1x1x128xf32>
    %10 = vector.broadcast %9 : vector<1x1x128xf32> to vector<8x8x128xf32>
    %11 = arith.addf %7, %10 : vector<8x8x128xf32>
    %c0_7 = arith.constant 0 : index
    %c0_8 = arith.constant 0 : index
    %c0_9 = arith.constant 0 : index
    %12 = vector.load %arg9[%c0_7, %c0_8, %c0_9] : memref<8x8x128xf32, #tpu.memory_space<vmem>>, vector<8x8x128xf32>
    tpu.vector_store %arg9[%c0_7, %c0_8, %c0_9], %11 {strides = array<i32>} : memref<8x8x128xf32, #tpu.memory_space<vmem>>, vector<8x8x128xf32>,
    %c0_10 = arith.constant 0 : index
    %c0_11 = arith.constant 0 : index
    %13 = vector.load %arg4[%c0_10, %c0_11] : memref<32x128xf32, #tpu.memory_space<vmem>>, vector<32x128xf32>
    %c0_12 = arith.constant 0 : index
    %c0_13 = arith.constant 0 : index
    %14 = vector.load %arg10[%c0_12, %c0_13] : memref<8x32xf32, #tpu.memory_space<vmem>>, vector<8x32xf32>
    %c0_14 = arith.constant 0 : index
    %c0_15 = arith.constant 0 : index
    %15 = vector.load %arg11[%c0_14, %c0_15] : memref<8x32xf32, #tpu.memory_space<vmem>>, vector<8x32xf32>
    %c0_i32_16 = arith.constant 0 : i32
    %16 = arith.index_cast %c0_i32_16 : i32 to index
    %c0_17 = arith.constant 0 : index
    %c0_18 = arith.constant 0 : index
    %17 = vector.load %arg9[%16, %c0_17, %c0_18] : memref<8x8x128xf32, #tpu.memory_space<vmem>>, vector<1x8x128xf32>
    %18 = vector.shape_cast %17 : vector<1x8x128xf32> to vector<8x128xf32>
    %cst_19 = arith.constant dense<0.000000e+00> : vector<8x128xf32>
    %19 = tpu.matmul %14, %13, %cst_19 {dimension_numbers = #tpu.dot_dimension_numbers<[1], [0], [0], [1], [0, 0, 1, 1], [], []>} : vector<8x32xf32>, vector<32x128xf32>, vector<8x128xf32> -> vector<8x128xf32>
    %20 = arith.addf %18, %19 : vector<8x128xf32>
    %21 = vector.extract_strided_slice %20 {offsets = [0, 0], sizes = [8, 32], strides = [1, 1]} : vector<8x128xf32> to vector<8x32xf32>
    %22 = arith.negf %21 : vector<8x32xf32>
    %23 = math.exp %22 : vector<8x32xf32>
    %cst_20 = arith.constant 1.000000e+00 : f32
    %24 = vector.broadcast %cst_20 : f32 to vector<8x32xf32>
    %25 = arith.addf %24, %23 : vector<8x32xf32>
    %26 = arith.divf %24, %25 : vector<8x32xf32>
    %27 = vector.extract_strided_slice %20 {offsets = [0, 32], sizes = [8, 32], strides = [1, 1]} : vector<8x128xf32> to vector<8x32xf32>
    %28 = arith.negf %27 : vector<8x32xf32>
    %29 = math.exp %28 : vector<8x32xf32>
    %cst_21 = arith.constant 1.000000e+00 : f32
    %30 = vector.broadcast %cst_21 : f32 to vector<8x32xf32>
    %31 = arith.addf %30, %29 : vector<8x32xf32>
    %32 = arith.divf %30, %31 : vector<8x32xf32>
    %33 = vector.extract_strided_slice %20 {offsets = [0, 64], sizes = [8, 32], strides = [1, 1]} : vector<8x128xf32> to vector<8x32xf32>
    %34 = math.tanh %33 : vector<8x32xf32>
    %35 = vector.extract_strided_slice %20 {offsets = [0, 96], sizes = [8, 32], strides = [1, 1]} : vector<8x128xf32> to vector<8x32xf32>
    %36 = arith.negf %35 : vector<8x32xf32>
    %37 = math.exp %36 : vector<8x32xf32>
    %cst_22 = arith.constant 1.000000e+00 : f32
    %38 = vector.broadcast %cst_22 : f32 to vector<8x32xf32>
    %39 = arith.addf %38, %37 : vector<8x32xf32>
    %40 = arith.divf %38, %39 : vector<8x32xf32>
    %41 = arith.mulf %32, %15 : vector<8x32xf32>
    %42 = arith.mulf %26, %34 : vector<8x32xf32>
    %43 = arith.addf %41, %42 : vector<8x32xf32>
    %44 = math.tanh %43 : vector<8x32xf32>
    %45 = arith.mulf %40, %44 : vector<8x32xf32>
    %c1_i32 = arith.constant 1 : i32
    %46 = arith.index_cast %c1_i32 : i32 to index
    %c0_23 = arith.constant 0 : index
    %c0_24 = arith.constant 0 : index
    %47 = vector.load %arg9[%46, %c0_23, %c0_24] : memref<8x8x128xf32, #tpu.memory_space<vmem>>, vector<1x8x128xf32>
    %48 = vector.shape_cast %47 : vector<1x8x128xf32> to vector<8x128xf32>
    %cst_25 = arith.constant dense<0.000000e+00> : vector<8x128xf32>
    %49 = tpu.matmul %45, %13, %cst_25 {dimension_numbers = #tpu.dot_dimension_numbers<[1], [0], [0], [1], [0, 0, 1, 1], [], []>} : vector<8x32xf32>, vector<32x128xf32>, vector<8x128xf32> -> vector<8x128xf32>
    %50 = arith.addf %48, %49 : vector<8x128xf32>
    %51 = vector.extract_strided_slice %50 {offsets = [0, 0], sizes = [8, 32], strides = [1, 1]} : vector<8x128xf32> to vector<8x32xf32>
    %52 = arith.negf %51 : vector<8x32xf32>
    %53 = math.exp %52 : vector<8x32xf32>
    %cst_26 = arith.constant 1.000000e+00 : f32
    %54 = vector.broadcast %cst_26 : f32 to vector<8x32xf32>
    %55 = arith.addf %54, %53 : vector<8x32xf32>
    %56 = arith.divf %54, %55 : vector<8x32xf32>
    %57 = vector.extract_strided_slice %50 {offsets = [0, 32], sizes = [8, 32], strides = [1, 1]} : vector<8x128xf32> to vector<8x32xf32>
    %58 = arith.negf %57 : vector<8x32xf32>
    %59 = math.exp %58 : vector<8x32xf32>
    %cst_27 = arith.constant 1.000000e+00 : f32
    %60 = vector.broadcast %cst_27 : f32 to vector<8x32xf32>
    %61 = arith.addf %60, %59 : vector<8x32xf32>
    %62 = arith.divf %60, %61 : vector<8x32xf32>
    %63 = vector.extract_strided_slice %50 {offsets = [0, 64], sizes = [8, 32], strides = [1, 1]} : vector<8x128xf32> to vector<8x32xf32>
    %64 = math.tanh %63 : vector<8x32xf32>
    %65 = vector.extract_strided_slice %50 {offsets = [0, 96], sizes = [8, 32], strides = [1, 1]} : vector<8x128xf32> to vector<8x32xf32>
    %66 = arith.negf %65 : vector<8x32xf32>
    %67 = math.exp %66 : vector<8x32xf32>
    %cst_28 = arith.constant 1.000000e+00 : f32
    %68 = vector.broadcast %cst_28 : f32 to vector<8x32xf32>
    %69 = arith.addf %68, %67 : vector<8x32xf32>
    %70 = arith.divf %68, %69 : vector<8x32xf32>
    %71 = arith.mulf %62, %43 : vector<8x32xf32>
    %72 = arith.mulf %56, %64 : vector<8x32xf32>
    %73 = arith.addf %71, %72 : vector<8x32xf32>
    %74 = math.tanh %73 : vector<8x32xf32>
    %75 = arith.mulf %70, %74 : vector<8x32xf32>
    %c2_i32 = arith.constant 2 : i32
    %76 = arith.index_cast %c2_i32 : i32 to index
    %c0_29 = arith.constant 0 : index
    %c0_30 = arith.constant 0 : index
    %77 = vector.load %arg9[%76, %c0_29, %c0_30] : memref<8x8x128xf32, #tpu.memory_space<vmem>>, vector<1x8x128xf32>
    %78 = vector.shape_cast %77 : vector<1x8x128xf32> to vector<8x128xf32>
    %cst_31 = arith.constant dense<0.000000e+00> : vector<8x128xf32>
    %79 = tpu.matmul %75, %13, %cst_31 {dimension_numbers = #tpu.dot_dimension_numbers<[1], [0], [0], [1], [0, 0, 1, 1], [], []>} : vector<8x32xf32>, vector<32x128xf32>, vector<8x128xf32> -> vector<8x128xf32>
    %80 = arith.addf %78, %79 : vector<8x128xf32>
    %81 = vector.extract_strided_slice %80 {offsets = [0, 0], sizes = [8, 32], strides = [1, 1]} : vector<8x128xf32> to vector<8x32xf32>
    %82 = arith.negf %81 : vector<8x32xf32>
    %83 = math.exp %82 : vector<8x32xf32>
    %cst_32 = arith.constant 1.000000e+00 : f32
    %84 = vector.broadcast %cst_32 : f32 to vector<8x32xf32>
    %85 = arith.addf %84, %83 : vector<8x32xf32>
    %86 = arith.divf %84, %85 : vector<8x32xf32>
    %87 = vector.extract_strided_slice %80 {offsets = [0, 32], sizes = [8, 32], strides = [1, 1]} : vector<8x128xf32> to vector<8x32xf32>
    %88 = arith.negf %87 : vector<8x32xf32>
    %89 = math.exp %88 : vector<8x32xf32>
    %cst_33 = arith.constant 1.000000e+00 : f32
    %90 = vector.broadcast %cst_33 : f32 to vector<8x32xf32>
    %91 = arith.addf %90, %89 : vector<8x32xf32>
    %92 = arith.divf %90, %91 : vector<8x32xf32>
    %93 = vector.extract_strided_slice %80 {offsets = [0, 64], sizes = [8, 32], strides = [1, 1]} : vector<8x128xf32> to vector<8x32xf32>
    %94 = math.tanh %93 : vector<8x32xf32>
    %95 = vector.extract_strided_slice %80 {offsets = [0, 96], sizes = [8, 32], strides = [1, 1]} : vector<8x128xf32> to vector<8x32xf32>
    %96 = arith.negf %95 : vector<8x32xf32>
    %97 = math.exp %96 : vector<8x32xf32>
    %cst_34 = arith.constant 1.000000e+00 : f32
    %98 = vector.broadcast %cst_34 : f32 to vector<8x32xf32>
    %99 = arith.addf %98, %97 : vector<8x32xf32>
    %100 = arith.divf %98, %99 : vector<8x32xf32>
    %101 = arith.mulf %92, %73 : vector<8x32xf32>
    %102 = arith.mulf %86, %94 : vector<8x32xf32>
    %103 = arith.addf %101, %102 : vector<8x32xf32>
    %104 = math.tanh %103 : vector<8x32xf32>
    %105 = arith.mulf %100, %104 : vector<8x32xf32>
    %c3_i32 = arith.constant 3 : i32
    %106 = arith.index_cast %c3_i32 : i32 to index
    %c0_35 = arith.constant 0 : index
    %c0_36 = arith.constant 0 : index
    %107 = vector.load %arg9[%106, %c0_35, %c0_36] : memref<8x8x128xf32, #tpu.memory_space<vmem>>, vector<1x8x128xf32>
    %108 = vector.shape_cast %107 : vector<1x8x128xf32> to vector<8x128xf32>
    %cst_37 = arith.constant dense<0.000000e+00> : vector<8x128xf32>
    %109 = tpu.matmul %105, %13, %cst_37 {dimension_numbers = #tpu.dot_dimension_numbers<[1], [0], [0], [1], [0, 0, 1, 1], [], []>} : vector<8x32xf32>, vector<32x128xf32>, vector<8x128xf32> -> vector<8x128xf32>
    %110 = arith.addf %108, %109 : vector<8x128xf32>
    %111 = vector.extract_strided_slice %110 {offsets = [0, 0], sizes = [8, 32], strides = [1, 1]} : vector<8x128xf32> to vector<8x32xf32>
    %112 = arith.negf %111 : vector<8x32xf32>
    %113 = math.exp %112 : vector<8x32xf32>
    %cst_38 = arith.constant 1.000000e+00 : f32
    %114 = vector.broadcast %cst_38 : f32 to vector<8x32xf32>
    %115 = arith.addf %114, %113 : vector<8x32xf32>
    %116 = arith.divf %114, %115 : vector<8x32xf32>
    %117 = vector.extract_strided_slice %110 {offsets = [0, 32], sizes = [8, 32], strides = [1, 1]} : vector<8x128xf32> to vector<8x32xf32>
    %118 = arith.negf %117 : vector<8x32xf32>
    %119 = math.exp %118 : vector<8x32xf32>
    %cst_39 = arith.constant 1.000000e+00 : f32
    %120 = vector.broadcast %cst_39 : f32 to vector<8x32xf32>
    %121 = arith.addf %120, %119 : vector<8x32xf32>
    %122 = arith.divf %120, %121 : vector<8x32xf32>
    %123 = vector.extract_strided_slice %110 {offsets = [0, 64], sizes = [8, 32], strides = [1, 1]} : vector<8x128xf32> to vector<8x32xf32>
    %124 = math.tanh %123 : vector<8x32xf32>
    %125 = vector.extract_strided_slice %110 {offsets = [0, 96], sizes = [8, 32], strides = [1, 1]} : vector<8x128xf32> to vector<8x32xf32>
    %126 = arith.negf %125 : vector<8x32xf32>
    %127 = math.exp %126 : vector<8x32xf32>
    %cst_40 = arith.constant 1.000000e+00 : f32
    %128 = vector.broadcast %cst_40 : f32 to vector<8x32xf32>
    %129 = arith.addf %128, %127 : vector<8x32xf32>
    %130 = arith.divf %128, %129 : vector<8x32xf32>
    %131 = arith.mulf %122, %103 : vector<8x32xf32>
    %132 = arith.mulf %116, %124 : vector<8x32xf32>
    %133 = arith.addf %131, %132 : vector<8x32xf32>
    %134 = math.tanh %133 : vector<8x32xf32>
    %135 = arith.mulf %130, %134 : vector<8x32xf32>
    %c4_i32 = arith.constant 4 : i32
    %136 = arith.index_cast %c4_i32 : i32 to index
    %c0_41 = arith.constant 0 : index
    %c0_42 = arith.constant 0 : index
    %137 = vector.load %arg9[%136, %c0_41, %c0_42] : memref<8x8x128xf32, #tpu.memory_space<vmem>>, vector<1x8x128xf32>
    %138 = vector.shape_cast %137 : vector<1x8x128xf32> to vector<8x128xf32>
    %cst_43 = arith.constant dense<0.000000e+00> : vector<8x128xf32>
    %139 = tpu.matmul %135, %13, %cst_43 {dimension_numbers = #tpu.dot_dimension_numbers<[1], [0], [0], [1], [0, 0, 1, 1], [], []>} : vector<8x32xf32>, vector<32x128xf32>, vector<8x128xf32> -> vector<8x128xf32>
    %140 = arith.addf %138, %139 : vector<8x128xf32>
    %141 = vector.extract_strided_slice %140 {offsets = [0, 0], sizes = [8, 32], strides = [1, 1]} : vector<8x128xf32> to vector<8x32xf32>
    %142 = arith.negf %141 : vector<8x32xf32>
    %143 = math.exp %142 : vector<8x32xf32>
    %cst_44 = arith.constant 1.000000e+00 : f32
    %144 = vector.broadcast %cst_44 : f32 to vector<8x32xf32>
    %145 = arith.addf %144, %143 : vector<8x32xf32>
    %146 = arith.divf %144, %145 : vector<8x32xf32>
    %147 = vector.extract_strided_slice %140 {offsets = [0, 32], sizes = [8, 32], strides = [1, 1]} : vector<8x128xf32> to vector<8x32xf32>
    %148 = arith.negf %147 : vector<8x32xf32>
    %149 = math.exp %148 : vector<8x32xf32>
    %cst_45 = arith.constant 1.000000e+00 : f32
    %150 = vector.broadcast %cst_45 : f32 to vector<8x32xf32>
    %151 = arith.addf %150, %149 : vector<8x32xf32>
    %152 = arith.divf %150, %151 : vector<8x32xf32>
    %153 = vector.extract_strided_slice %140 {offsets = [0, 64], sizes = [8, 32], strides = [1, 1]} : vector<8x128xf32> to vector<8x32xf32>
    %154 = math.tanh %153 : vector<8x32xf32>
    %155 = vector.extract_strided_slice %140 {offsets = [0, 96], sizes = [8, 32], strides = [1, 1]} : vector<8x128xf32> to vector<8x32xf32>
    %156 = arith.negf %155 : vector<8x32xf32>
    %157 = math.exp %156 : vector<8x32xf32>
    %cst_46 = arith.constant 1.000000e+00 : f32
    %158 = vector.broadcast %cst_46 : f32 to vector<8x32xf32>
    %159 = arith.addf %158, %157 : vector<8x32xf32>
    %160 = arith.divf %158, %159 : vector<8x32xf32>
    %161 = arith.mulf %152, %133 : vector<8x32xf32>
    %162 = arith.mulf %146, %154 : vector<8x32xf32>
    %163 = arith.addf %161, %162 : vector<8x32xf32>
    %164 = math.tanh %163 : vector<8x32xf32>
    %165 = arith.mulf %160, %164 : vector<8x32xf32>
    %c5_i32 = arith.constant 5 : i32
    %166 = arith.index_cast %c5_i32 : i32 to index
    %c0_47 = arith.constant 0 : index
    %c0_48 = arith.constant 0 : index
    %167 = vector.load %arg9[%166, %c0_47, %c0_48] : memref<8x8x128xf32, #tpu.memory_space<vmem>>, vector<1x8x128xf32>
    %168 = vector.shape_cast %167 : vector<1x8x128xf32> to vector<8x128xf32>
    %cst_49 = arith.constant dense<0.000000e+00> : vector<8x128xf32>
    %169 = tpu.matmul %165, %13, %cst_49 {dimension_numbers = #tpu.dot_dimension_numbers<[1], [0], [0], [1], [0, 0, 1, 1], [], []>} : vector<8x32xf32>, vector<32x128xf32>, vector<8x128xf32> -> vector<8x128xf32>
    %170 = arith.addf %168, %169 : vector<8x128xf32>
    %171 = vector.extract_strided_slice %170 {offsets = [0, 0], sizes = [8, 32], strides = [1, 1]} : vector<8x128xf32> to vector<8x32xf32>
    %172 = arith.negf %171 : vector<8x32xf32>
    %173 = math.exp %172 : vector<8x32xf32>
    %cst_50 = arith.constant 1.000000e+00 : f32
    %174 = vector.broadcast %cst_50 : f32 to vector<8x32xf32>
    %175 = arith.addf %174, %173 : vector<8x32xf32>
    %176 = arith.divf %174, %175 : vector<8x32xf32>
    %177 = vector.extract_strided_slice %170 {offsets = [0, 32], sizes = [8, 32], strides = [1, 1]} : vector<8x128xf32> to vector<8x32xf32>
    %178 = arith.negf %177 : vector<8x32xf32>
    %179 = math.exp %178 : vector<8x32xf32>
    %cst_51 = arith.constant 1.000000e+00 : f32
    %180 = vector.broadcast %cst_51 : f32 to vector<8x32xf32>
    %181 = arith.addf %180, %179 : vector<8x32xf32>
    %182 = arith.divf %180, %181 : vector<8x32xf32>
    %183 = vector.extract_strided_slice %170 {offsets = [0, 64], sizes = [8, 32], strides = [1, 1]} : vector<8x128xf32> to vector<8x32xf32>
    %184 = math.tanh %183 : vector<8x32xf32>
    %185 = vector.extract_strided_slice %170 {offsets = [0, 96], sizes = [8, 32], strides = [1, 1]} : vector<8x128xf32> to vector<8x32xf32>
    %186 = arith.negf %185 : vector<8x32xf32>
    %187 = math.exp %186 : vector<8x32xf32>
    %cst_52 = arith.constant 1.000000e+00 : f32
    %188 = vector.broadcast %cst_52 : f32 to vector<8x32xf32>
    %189 = arith.addf %188, %187 : vector<8x32xf32>
    %190 = arith.divf %188, %189 : vector<8x32xf32>
    %191 = arith.mulf %182, %163 : vector<8x32xf32>
    %192 = arith.mulf %176, %184 : vector<8x32xf32>
    %193 = arith.addf %191, %192 : vector<8x32xf32>
    %194 = math.tanh %193 : vector<8x32xf32>
    %195 = arith.mulf %190, %194 : vector<8x32xf32>
    %c6_i32 = arith.constant 6 : i32
    %196 = arith.index_cast %c6_i32 : i32 to index
    %c0_53 = arith.constant 0 : index
    %c0_54 = arith.constant 0 : index
    %197 = vector.load %arg9[%196, %c0_53, %c0_54] : memref<8x8x128xf32, #tpu.memory_space<vmem>>, vector<1x8x128xf32>
    %198 = vector.shape_cast %197 : vector<1x8x128xf32> to vector<8x128xf32>
    %cst_55 = arith.constant dense<0.000000e+00> : vector<8x128xf32>
    %199 = tpu.matmul %195, %13, %cst_55 {dimension_numbers = #tpu.dot_dimension_numbers<[1], [0], [0], [1], [0, 0, 1, 1], [], []>} : vector<8x32xf32>, vector<32x128xf32>, vector<8x128xf32> -> vector<8x128xf32>
    %200 = arith.addf %198, %199 : vector<8x128xf32>
    %201 = vector.extract_strided_slice %200 {offsets = [0, 0], sizes = [8, 32], strides = [1, 1]} : vector<8x128xf32> to vector<8x32xf32>
    %202 = arith.negf %201 : vector<8x32xf32>
    %203 = math.exp %202 : vector<8x32xf32>
    %cst_56 = arith.constant 1.000000e+00 : f32
    %204 = vector.broadcast %cst_56 : f32 to vector<8x32xf32>
    %205 = arith.addf %204, %203 : vector<8x32xf32>
    %206 = arith.divf %204, %205 : vector<8x32xf32>
    %207 = vector.extract_strided_slice %200 {offsets = [0, 32], sizes = [8, 32], strides = [1, 1]} : vector<8x128xf32> to vector<8x32xf32>
    %208 = arith.negf %207 : vector<8x32xf32>
    %209 = math.exp %208 : vector<8x32xf32>
    %cst_57 = arith.constant 1.000000e+00 : f32
    %210 = vector.broadcast %cst_57 : f32 to vector<8x32xf32>
    %211 = arith.addf %210, %209 : vector<8x32xf32>
    %212 = arith.divf %210, %211 : vector<8x32xf32>
    %213 = vector.extract_strided_slice %200 {offsets = [0, 64], sizes = [8, 32], strides = [1, 1]} : vector<8x128xf32> to vector<8x32xf32>
    %214 = math.tanh %213 : vector<8x32xf32>
    %215 = vector.extract_strided_slice %200 {offsets = [0, 96], sizes = [8, 32], strides = [1, 1]} : vector<8x128xf32> to vector<8x32xf32>
    %216 = arith.negf %215 : vector<8x32xf32>
    %217 = math.exp %216 : vector<8x32xf32>
    %cst_58 = arith.constant 1.000000e+00 : f32
    %218 = vector.broadcast %cst_58 : f32 to vector<8x32xf32>
    %219 = arith.addf %218, %217 : vector<8x32xf32>
    %220 = arith.divf %218, %219 : vector<8x32xf32>
    %221 = arith.mulf %212, %193 : vector<8x32xf32>
    %222 = arith.mulf %206, %214 : vector<8x32xf32>
    %223 = arith.addf %221, %222 : vector<8x32xf32>
    %224 = math.tanh %223 : vector<8x32xf32>
    %225 = arith.mulf %220, %224 : vector<8x32xf32>
    %c7_i32 = arith.constant 7 : i32
    %226 = arith.index_cast %c7_i32 : i32 to index
    %c0_59 = arith.constant 0 : index
    %c0_60 = arith.constant 0 : index
    %227 = vector.load %arg9[%226, %c0_59, %c0_60] : memref<8x8x128xf32, #tpu.memory_space<vmem>>, vector<1x8x128xf32>
    %228 = vector.shape_cast %227 : vector<1x8x128xf32> to vector<8x128xf32>
    %cst_61 = arith.constant dense<0.000000e+00> : vector<8x128xf32>
    %229 = tpu.matmul %225, %13, %cst_61 {dimension_numbers = #tpu.dot_dimension_numbers<[1], [0], [0], [1], [0, 0, 1, 1], [], []>} : vector<8x32xf32>, vector<32x128xf32>, vector<8x128xf32> -> vector<8x128xf32>
    %230 = arith.addf %228, %229 : vector<8x128xf32>
    %231 = vector.extract_strided_slice %230 {offsets = [0, 0], sizes = [8, 32], strides = [1, 1]} : vector<8x128xf32> to vector<8x32xf32>
    %232 = arith.negf %231 : vector<8x32xf32>
    %233 = math.exp %232 : vector<8x32xf32>
    %cst_62 = arith.constant 1.000000e+00 : f32
    %234 = vector.broadcast %cst_62 : f32 to vector<8x32xf32>
    %235 = arith.addf %234, %233 : vector<8x32xf32>
    %236 = arith.divf %234, %235 : vector<8x32xf32>
    %237 = vector.extract_strided_slice %230 {offsets = [0, 32], sizes = [8, 32], strides = [1, 1]} : vector<8x128xf32> to vector<8x32xf32>
    %238 = arith.negf %237 : vector<8x32xf32>
    %239 = math.exp %238 : vector<8x32xf32>
    %cst_63 = arith.constant 1.000000e+00 : f32
    %240 = vector.broadcast %cst_63 : f32 to vector<8x32xf32>
    %241 = arith.addf %240, %239 : vector<8x32xf32>
    %242 = arith.divf %240, %241 : vector<8x32xf32>
    %243 = vector.extract_strided_slice %230 {offsets = [0, 64], sizes = [8, 32], strides = [1, 1]} : vector<8x128xf32> to vector<8x32xf32>
    %244 = math.tanh %243 : vector<8x32xf32>
    %245 = vector.extract_strided_slice %230 {offsets = [0, 96], sizes = [8, 32], strides = [1, 1]} : vector<8x128xf32> to vector<8x32xf32>
    %246 = arith.negf %245 : vector<8x32xf32>
    %247 = math.exp %246 : vector<8x32xf32>
    %cst_64 = arith.constant 1.000000e+00 : f32
    %248 = vector.broadcast %cst_64 : f32 to vector<8x32xf32>
    %249 = arith.addf %248, %247 : vector<8x32xf32>
    %250 = arith.divf %248, %249 : vector<8x32xf32>
    %251 = arith.mulf %242, %223 : vector<8x32xf32>
    %252 = arith.mulf %236, %244 : vector<8x32xf32>
    %253 = arith.addf %251, %252 : vector<8x32xf32>
    %254 = math.tanh %253 : vector<8x32xf32>
    %255 = arith.mulf %250, %254 : vector<8x32xf32>
    %c8_i32 = arith.constant 8 : i32
    %c0_65 = arith.constant 0 : index
    %c0_66 = arith.constant 0 : index
    %256 = vector.load %arg10[%c0_65, %c0_66] : memref<8x32xf32, #tpu.memory_space<vmem>>, vector<8x32xf32>
    tpu.vector_store %arg10[%c0_65, %c0_66], %255 {strides = array<i32>} : memref<8x32xf32, #tpu.memory_space<vmem>>, vector<8x32xf32>,
    %c0_67 = arith.constant 0 : index
    %c0_68 = arith.constant 0 : index
    %257 = vector.load %arg11[%c0_67, %c0_68] : memref<8x32xf32, #tpu.memory_space<vmem>>, vector<8x32xf32>
    tpu.vector_store %arg11[%c0_67, %c0_68], %253 {strides = array<i32>} : memref<8x32xf32, #tpu.memory_space<vmem>>, vector<8x32xf32>,
    %c0_i32_69 = arith.constant 0 : i32
    %258 = arith.cmpi eq, %arg1, %c0_i32_69 : i32
    %259 = arith.extui %258 : i1 to i32
    %c0_i32_70 = arith.constant 0 : i32
    %260 = arith.cmpi ne, %259, %c0_i32_70 : i32
    scf.if %260 {
      %c0_71 = arith.constant 0 : index
      %c0_72 = arith.constant 0 : index
      %261 = vector.load %arg6[%c0_71, %c0_72] : memref<32x1xf32, #tpu.memory_space<vmem>>, vector<32x1xf32>
      %cst_73 = arith.constant dense<0.000000e+00> : vector<8x1xf32>
      %262 = tpu.matmul %255, %261, %cst_73 {dimension_numbers = #tpu.dot_dimension_numbers<[1], [0], [0], [1], [0, 0, 1, 1], [], []>} : vector<8x32xf32>, vector<32x1xf32>, vector<8x1xf32> -> vector<8x1xf32>
      %c0_74 = arith.constant 0 : index
      %c0_75 = arith.constant 0 : index
      %263 = vector.load %arg7[%c0_74, %c0_75] : memref<1x1xf32, #tpu.memory_space<vmem>>, vector<1x1xf32>
      %264 = vector.broadcast %263 : vector<1x1xf32> to vector<8x1xf32>
      %265 = arith.addf %262, %264 : vector<8x1xf32>
      %c0_76 = arith.constant 0 : index
      %c0_77 = arith.constant 0 : index
      %266 = vector.load %arg8[%c0_76, %c0_77] : memref<8x1xf32, #tpu.memory_space<vmem>>, vector<8x1xf32>
      tpu.vector_store %arg8[%c0_76, %c0_77], %265 {strides = array<i32>} : memref<8x1xf32, #tpu.memory_space<vmem>>, vector<8x1xf32>,
    } else {
    }
    return
  }
  func.func @transform_0(%arg0: i32, %arg1: i32) -> (i32, i32, i32) {
    %c0_i32 = arith.constant 0 : i32
    %c0_i32_0 = arith.constant 0 : i32
    return %arg1, %arg0, %c0_i32 : i32, i32, i32
  }
  func.func @transform_1(%arg0: i32, %arg1: i32) -> (i32, i32) {
    %c0_i32 = arith.constant 0 : i32
    %c0_i32_0 = arith.constant 0 : i32
    %c0_i32_1 = arith.constant 0 : i32
    return %c0_i32, %c0_i32_0 : i32, i32
  }
  func.func @transform_2(%arg0: i32, %arg1: i32) -> (i32, i32) {
    %c0_i32 = arith.constant 0 : i32
    %c0_i32_0 = arith.constant 0 : i32
    %c0_i32_1 = arith.constant 0 : i32
    return %c0_i32, %c0_i32_0 : i32, i32
  }
  func.func @transform_3(%arg0: i32, %arg1: i32) -> (i32, i32) {
    %c0_i32 = arith.constant 0 : i32
    %c0_i32_0 = arith.constant 0 : i32
    %c0_i32_1 = arith.constant 0 : i32
    return %c0_i32, %c0_i32_0 : i32, i32
  }
  func.func @transform_4(%arg0: i32, %arg1: i32) -> (i32, i32) {
    %c0_i32 = arith.constant 0 : i32
    %c0_i32_0 = arith.constant 0 : i32
    %c0_i32_1 = arith.constant 0 : i32
    return %c0_i32, %c0_i32_0 : i32, i32
  }
  func.func @transform_5(%arg0: i32, %arg1: i32) -> (i32, i32) {
    %c0_i32 = arith.constant 0 : i32
    %c0_i32_0 = arith.constant 0 : i32
    %c0_i32_1 = arith.constant 0 : i32
    return %c0_i32, %c0_i32_0 : i32, i32
  }
  func.func @transform_6(%arg0: i32, %arg1: i32) -> (i32, i32) {
    %c0_i32 = arith.constant 0 : i32
    %c0_i32_0 = arith.constant 0 : i32
    return %arg0, %c0_i32 : i32, i32
  }
}

module attributes {stable_mosaic.version = 11 : i64} {
  func.func @lstm_chunk_kernel(%arg0: i32, %arg1: i32, %arg2: memref<8x8x16xf32, #tpu.memory_space<vmem>>, %arg3: memref<16x128xf32, #tpu.memory_space<vmem>>, %arg4: memref<32x128xf32, #tpu.memory_space<vmem>>, %arg5: memref<1x128xf32, #tpu.memory_space<vmem>>, %arg6: memref<32x1xf32, #tpu.memory_space<vmem>>, %arg7: memref<1x1xf32, #tpu.memory_space<vmem>>, %arg8: memref<8x1xf32, #tpu.memory_space<vmem>>, %arg9: memref<8x8x128xf32, #tpu.memory_space<vmem>>, %arg10: memref<8x32xf32, #tpu.memory_space<vmem>>, %arg11: memref<8x32xf32, #tpu.memory_space<vmem>>) attributes {dimension_semantics = [#tpu.dimension_semantics<parallel>, #tpu.dimension_semantics<arbitrary>], iteration_bounds = array<i64: 1, 1>, scalar_prefetch = 0 : i64, scratch_operands = 3 : i64, tpu.core_type = #tpu.core_type<tc>, window_params = [{transform_indices = @transform_0, window_bounds = array<i64: 8, 8, 16>}, {pipeline_mode = #tpu.pipeline_mode<synchronous>, transform_indices = @transform_1, window_bounds = array<i64: 16, 128>}, {pipeline_mode = #tpu.pipeline_mode<synchronous>, transform_indices = @transform_2, window_bounds = array<i64: 32, 128>}, {pipeline_mode = #tpu.pipeline_mode<synchronous>, transform_indices = @transform_3, window_bounds = array<i64: 1, 128>}, {pipeline_mode = #tpu.pipeline_mode<synchronous>, transform_indices = @transform_4, window_bounds = array<i64: 32, 1>}, {pipeline_mode = #tpu.pipeline_mode<synchronous>, transform_indices = @transform_5, window_bounds = array<i64: 1, 1>}, {transform_indices = @transform_6, window_bounds = array<i64: 8, 1>}]} {
    %c0_i32 = arith.constant 0 : i32
    %0 = arith.cmpi eq, %arg1, %c0_i32 : i32
    %1 = arith.extui %0 : i1 to i32
    %c0_i32_0 = arith.constant 0 : i32
    %2 = arith.cmpi ne, %1, %c0_i32_0 : i32
    scf.if %2 {
      %cst_71 = arith.constant 0.000000e+00 : f32
      %261 = vector.broadcast %cst_71 : f32 to vector<8x32xf32>
      %c0_72 = arith.constant 0 : index
      %c0_73 = arith.constant 0 : index
      %262 = vector.load %arg10[%c0_72, %c0_73] : memref<8x32xf32, #tpu.memory_space<vmem>>, vector<8x32xf32>
      tpu.vector_store %arg10[%c0_72, %c0_73], %261 {strides = array<i32>} : memref<8x32xf32, #tpu.memory_space<vmem>>, vector<8x32xf32>,
      %cst_74 = arith.constant 0.000000e+00 : f32
      %263 = vector.broadcast %cst_74 : f32 to vector<8x32xf32>
      %c0_75 = arith.constant 0 : index
      %c0_76 = arith.constant 0 : index
      %264 = vector.load %arg11[%c0_75, %c0_76] : memref<8x32xf32, #tpu.memory_space<vmem>>, vector<8x32xf32>
      tpu.vector_store %arg11[%c0_75, %c0_76], %263 {strides = array<i32>} : memref<8x32xf32, #tpu.memory_space<vmem>>, vector<8x32xf32>,
    } else {
    }
    %c0 = arith.constant 0 : index
    %c0_1 = arith.constant 0 : index
    %c0_2 = arith.constant 0 : index
    %3 = vector.load %arg2[%c0, %c0_1, %c0_2] : memref<8x8x16xf32, #tpu.memory_space<vmem>>, vector<8x8x16xf32>
    %4 = vector.shape_cast %3 : vector<8x8x16xf32> to vector<64x16xf32>
    %c0_3 = arith.constant 0 : index
    %c0_4 = arith.constant 0 : index
    %5 = vector.load %arg3[%c0_3, %c0_4] : memref<16x128xf32, #tpu.memory_space<vmem>>, vector<16x128xf32>
    %cst = arith.constant dense<0.000000e+00> : vector<64x128xf32>
    %6 = tpu.matmul %4, %5, %cst {dimension_numbers = #tpu.dot_dimension_numbers<[1], [0], [0], [1], [0, 0, 1, 1], [], []>} : vector<64x16xf32>, vector<16x128xf32>, vector<64x128xf32> -> vector<64x128xf32>
    %7 = vector.shape_cast %6 : vector<64x128xf32> to vector<8x8x128xf32>
    %c0_5 = arith.constant 0 : index
    %c0_6 = arith.constant 0 : index
    %8 = vector.load %arg5[%c0_5, %c0_6] : memref<1x128xf32, #tpu.memory_space<vmem>>, vector<1x128xf32>
    %9 = vector.shape_cast %8 : vector<1x128xf32> to vector<1x1x128xf32>
    %10 = vector.broadcast %9 : vector<1x1x128xf32> to vector<8x8x128xf32>
    %11 = arith.addf %7, %10 : vector<8x8x128xf32>
    %c0_7 = arith.constant 0 : index
    %c0_8 = arith.constant 0 : index
    %c0_9 = arith.constant 0 : index
    %12 = vector.load %arg9[%c0_7, %c0_8, %c0_9] : memref<8x8x128xf32, #tpu.memory_space<vmem>>, vector<8x8x128xf32>
    tpu.vector_store %arg9[%c0_7, %c0_8, %c0_9], %11 {strides = array<i32>} : memref<8x8x128xf32, #tpu.memory_space<vmem>>, vector<8x8x128xf32>,
    %c0_10 = arith.constant 0 : index
    %c0_11 = arith.constant 0 : index
    %13 = vector.load %arg4[%c0_10, %c0_11] : memref<32x128xf32, #tpu.memory_space<vmem>>, vector<32x128xf32>
    %c0_12 = arith.constant 0 : index
    %c0_13 = arith.constant 0 : index
    %14 = vector.load %arg10[%c0_12, %c0_13] : memref<8x32xf32, #tpu.memory_space<vmem>>, vector<8x32xf32>
    %c0_14 = arith.constant 0 : index
    %c0_15 = arith.constant 0 : index
    %15 = vector.load %arg11[%c0_14, %c0_15] : memref<8x32xf32, #tpu.memory_space<vmem>>, vector<8x32xf32>
    %c0_i32_16 = arith.constant 0 : i32
    %16 = arith.index_cast %c0_i32_16 : i32 to index
    %c0_17 = arith.constant 0 : index
    %c0_18 = arith.constant 0 : index
    %17 = vector.load %arg9[%16, %c0_17, %c0_18] : memref<8x8x128xf32, #tpu.memory_space<vmem>>, vector<1x8x128xf32>
    %18 = vector.shape_cast %17 : vector<1x8x128xf32> to vector<8x128xf32>
    %cst_19 = arith.constant dense<0.000000e+00> : vector<8x128xf32>
    %19 = tpu.matmul %14, %13, %cst_19 {dimension_numbers = #tpu.dot_dimension_numbers<[1], [0], [0], [1], [0, 0, 1, 1], [], []>} : vector<8x32xf32>, vector<32x128xf32>, vector<8x128xf32> -> vector<8x128xf32>
    %20 = arith.addf %18, %19 : vector<8x128xf32>
    %21 = vector.extract_strided_slice %20 {offsets = [0, 0], sizes = [8, 32], strides = [1, 1]} : vector<8x128xf32> to vector<8x32xf32>
    %22 = arith.negf %21 : vector<8x32xf32>
    %23 = math.exp %22 : vector<8x32xf32>
    %cst_20 = arith.constant 1.000000e+00 : f32
    %24 = vector.broadcast %cst_20 : f32 to vector<8x32xf32>
    %25 = arith.addf %24, %23 : vector<8x32xf32>
    %26 = arith.divf %24, %25 : vector<8x32xf32>
    %27 = vector.extract_strided_slice %20 {offsets = [0, 32], sizes = [8, 32], strides = [1, 1]} : vector<8x128xf32> to vector<8x32xf32>
    %28 = arith.negf %27 : vector<8x32xf32>
    %29 = math.exp %28 : vector<8x32xf32>
    %cst_21 = arith.constant 1.000000e+00 : f32
    %30 = vector.broadcast %cst_21 : f32 to vector<8x32xf32>
    %31 = arith.addf %30, %29 : vector<8x32xf32>
    %32 = arith.divf %30, %31 : vector<8x32xf32>
    %33 = vector.extract_strided_slice %20 {offsets = [0, 64], sizes = [8, 32], strides = [1, 1]} : vector<8x128xf32> to vector<8x32xf32>
    %34 = math.tanh %33 : vector<8x32xf32>
    %35 = vector.extract_strided_slice %20 {offsets = [0, 96], sizes = [8, 32], strides = [1, 1]} : vector<8x128xf32> to vector<8x32xf32>
    %36 = arith.negf %35 : vector<8x32xf32>
    %37 = math.exp %36 : vector<8x32xf32>
    %cst_22 = arith.constant 1.000000e+00 : f32
    %38 = vector.broadcast %cst_22 : f32 to vector<8x32xf32>
    %39 = arith.addf %38, %37 : vector<8x32xf32>
    %40 = arith.divf %38, %39 : vector<8x32xf32>
    %41 = arith.mulf %32, %15 : vector<8x32xf32>
    %42 = arith.mulf %26, %34 : vector<8x32xf32>
    %43 = arith.addf %41, %42 : vector<8x32xf32>
    %44 = math.tanh %43 : vector<8x32xf32>
    %45 = arith.mulf %40, %44 : vector<8x32xf32>
    %c1_i32 = arith.constant 1 : i32
    %46 = arith.index_cast %c1_i32 : i32 to index
    %c0_23 = arith.constant 0 : index
    %c0_24 = arith.constant 0 : index
    %47 = vector.load %arg9[%46, %c0_23, %c0_24] : memref<8x8x128xf32, #tpu.memory_space<vmem>>, vector<1x8x128xf32>
    %48 = vector.shape_cast %47 : vector<1x8x128xf32> to vector<8x128xf32>
    %cst_25 = arith.constant dense<0.000000e+00> : vector<8x128xf32>
    %49 = tpu.matmul %45, %13, %cst_25 {dimension_numbers = #tpu.dot_dimension_numbers<[1], [0], [0], [1], [0, 0, 1, 1], [], []>} : vector<8x32xf32>, vector<32x128xf32>, vector<8x128xf32> -> vector<8x128xf32>
    %50 = arith.addf %48, %49 : vector<8x128xf32>
    %51 = vector.extract_strided_slice %50 {offsets = [0, 0], sizes = [8, 32], strides = [1, 1]} : vector<8x128xf32> to vector<8x32xf32>
    %52 = arith.negf %51 : vector<8x32xf32>
    %53 = math.exp %52 : vector<8x32xf32>
    %cst_26 = arith.constant 1.000000e+00 : f32
    %54 = vector.broadcast %cst_26 : f32 to vector<8x32xf32>
    %55 = arith.addf %54, %53 : vector<8x32xf32>
    %56 = arith.divf %54, %55 : vector<8x32xf32>
    %57 = vector.extract_strided_slice %50 {offsets = [0, 32], sizes = [8, 32], strides = [1, 1]} : vector<8x128xf32> to vector<8x32xf32>
    %58 = arith.negf %57 : vector<8x32xf32>
    %59 = math.exp %58 : vector<8x32xf32>
    %cst_27 = arith.constant 1.000000e+00 : f32
    %60 = vector.broadcast %cst_27 : f32 to vector<8x32xf32>
    %61 = arith.addf %60, %59 : vector<8x32xf32>
    %62 = arith.divf %60, %61 : vector<8x32xf32>
    %63 = vector.extract_strided_slice %50 {offsets = [0, 64], sizes = [8, 32], strides = [1, 1]} : vector<8x128xf32> to vector<8x32xf32>
    %64 = math.tanh %63 : vector<8x32xf32>
    %65 = vector.extract_strided_slice %50 {offsets = [0, 96], sizes = [8, 32], strides = [1, 1]} : vector<8x128xf32> to vector<8x32xf32>
    %66 = arith.negf %65 : vector<8x32xf32>
    %67 = math.exp %66 : vector<8x32xf32>
    %cst_28 = arith.constant 1.000000e+00 : f32
    %68 = vector.broadcast %cst_28 : f32 to vector<8x32xf32>
    %69 = arith.addf %68, %67 : vector<8x32xf32>
    %70 = arith.divf %68, %69 : vector<8x32xf32>
    %71 = arith.mulf %62, %43 : vector<8x32xf32>
    %72 = arith.mulf %56, %64 : vector<8x32xf32>
    %73 = arith.addf %71, %72 : vector<8x32xf32>
    %74 = math.tanh %73 : vector<8x32xf32>
    %75 = arith.mulf %70, %74 : vector<8x32xf32>
    %c2_i32 = arith.constant 2 : i32
    %76 = arith.index_cast %c2_i32 : i32 to index
    %c0_29 = arith.constant 0 : index
    %c0_30 = arith.constant 0 : index
    %77 = vector.load %arg9[%76, %c0_29, %c0_30] : memref<8x8x128xf32, #tpu.memory_space<vmem>>, vector<1x8x128xf32>
    %78 = vector.shape_cast %77 : vector<1x8x128xf32> to vector<8x128xf32>
    %cst_31 = arith.constant dense<0.000000e+00> : vector<8x128xf32>
    %79 = tpu.matmul %75, %13, %cst_31 {dimension_numbers = #tpu.dot_dimension_numbers<[1], [0], [0], [1], [0, 0, 1, 1], [], []>} : vector<8x32xf32>, vector<32x128xf32>, vector<8x128xf32> -> vector<8x128xf32>
    %80 = arith.addf %78, %79 : vector<8x128xf32>
    %81 = vector.extract_strided_slice %80 {offsets = [0, 0], sizes = [8, 32], strides = [1, 1]} : vector<8x128xf32> to vector<8x32xf32>
    %82 = arith.negf %81 : vector<8x32xf32>
    %83 = math.exp %82 : vector<8x32xf32>
    %cst_32 = arith.constant 1.000000e+00 : f32
    %84 = vector.broadcast %cst_32 : f32 to vector<8x32xf32>
    %85 = arith.addf %84, %83 : vector<8x32xf32>
    %86 = arith.divf %84, %85 : vector<8x32xf32>
    %87 = vector.extract_strided_slice %80 {offsets = [0, 32], sizes = [8, 32], strides = [1, 1]} : vector<8x128xf32> to vector<8x32xf32>
    %88 = arith.negf %87 : vector<8x32xf32>
    %89 = math.exp %88 : vector<8x32xf32>
    %cst_33 = arith.constant 1.000000e+00 : f32
    %90 = vector.broadcast %cst_33 : f32 to vector<8x32xf32>
    %91 = arith.addf %90, %89 : vector<8x32xf32>
    %92 = arith.divf %90, %91 : vector<8x32xf32>
    %93 = vector.extract_strided_slice %80 {offsets = [0, 64], sizes = [8, 32], strides = [1, 1]} : vector<8x128xf32> to vector<8x32xf32>
    %94 = math.tanh %93 : vector<8x32xf32>
    %95 = vector.extract_strided_slice %80 {offsets = [0, 96], sizes = [8, 32], strides = [1, 1]} : vector<8x128xf32> to vector<8x32xf32>
    %96 = arith.negf %95 : vector<8x32xf32>
    %97 = math.exp %96 : vector<8x32xf32>
    %cst_34 = arith.constant 1.000000e+00 : f32
    %98 = vector.broadcast %cst_34 : f32 to vector<8x32xf32>
    %99 = arith.addf %98, %97 : vector<8x32xf32>
    %100 = arith.divf %98, %99 : vector<8x32xf32>
    %101 = arith.mulf %92, %73 : vector<8x32xf32>
    %102 = arith.mulf %86, %94 : vector<8x32xf32>
    %103 = arith.addf %101, %102 : vector<8x32xf32>
    %104 = math.tanh %103 : vector<8x32xf32>
    %105 = arith.mulf %100, %104 : vector<8x32xf32>
    %c3_i32 = arith.constant 3 : i32
    %106 = arith.index_cast %c3_i32 : i32 to index
    %c0_35 = arith.constant 0 : index
    %c0_36 = arith.constant 0 : index
    %107 = vector.load %arg9[%106, %c0_35, %c0_36] : memref<8x8x128xf32, #tpu.memory_space<vmem>>, vector<1x8x128xf32>
    %108 = vector.shape_cast %107 : vector<1x8x128xf32> to vector<8x128xf32>
    %cst_37 = arith.constant dense<0.000000e+00> : vector<8x128xf32>
    %109 = tpu.matmul %105, %13, %cst_37 {dimension_numbers = #tpu.dot_dimension_numbers<[1], [0], [0], [1], [0, 0, 1, 1], [], []>} : vector<8x32xf32>, vector<32x128xf32>, vector<8x128xf32> -> vector<8x128xf32>
    %110 = arith.addf %108, %109 : vector<8x128xf32>
    %111 = vector.extract_strided_slice %110 {offsets = [0, 0], sizes = [8, 32], strides = [1, 1]} : vector<8x128xf32> to vector<8x32xf32>
    %112 = arith.negf %111 : vector<8x32xf32>
    %113 = math.exp %112 : vector<8x32xf32>
    %cst_38 = arith.constant 1.000000e+00 : f32
    %114 = vector.broadcast %cst_38 : f32 to vector<8x32xf32>
    %115 = arith.addf %114, %113 : vector<8x32xf32>
    %116 = arith.divf %114, %115 : vector<8x32xf32>
    %117 = vector.extract_strided_slice %110 {offsets = [0, 32], sizes = [8, 32], strides = [1, 1]} : vector<8x128xf32> to vector<8x32xf32>
    %118 = arith.negf %117 : vector<8x32xf32>
    %119 = math.exp %118 : vector<8x32xf32>
    %cst_39 = arith.constant 1.000000e+00 : f32
    %120 = vector.broadcast %cst_39 : f32 to vector<8x32xf32>
    %121 = arith.addf %120, %119 : vector<8x32xf32>
    %122 = arith.divf %120, %121 : vector<8x32xf32>
    %123 = vector.extract_strided_slice %110 {offsets = [0, 64], sizes = [8, 32], strides = [1, 1]} : vector<8x128xf32> to vector<8x32xf32>
    %124 = math.tanh %123 : vector<8x32xf32>
    %125 = vector.extract_strided_slice %110 {offsets = [0, 96], sizes = [8, 32], strides = [1, 1]} : vector<8x128xf32> to vector<8x32xf32>
    %126 = arith.negf %125 : vector<8x32xf32>
    %127 = math.exp %126 : vector<8x32xf32>
    %cst_40 = arith.constant 1.000000e+00 : f32
    %128 = vector.broadcast %cst_40 : f32 to vector<8x32xf32>
    %129 = arith.addf %128, %127 : vector<8x32xf32>
    %130 = arith.divf %128, %129 : vector<8x32xf32>
    %131 = arith.mulf %122, %103 : vector<8x32xf32>
    %132 = arith.mulf %116, %124 : vector<8x32xf32>
    %133 = arith.addf %131, %132 : vector<8x32xf32>
    %134 = math.tanh %133 : vector<8x32xf32>
    %135 = arith.mulf %130, %134 : vector<8x32xf32>
    %c4_i32 = arith.constant 4 : i32
    %136 = arith.index_cast %c4_i32 : i32 to index
    %c0_41 = arith.constant 0 : index
    %c0_42 = arith.constant 0 : index
    %137 = vector.load %arg9[%136, %c0_41, %c0_42] : memref<8x8x128xf32, #tpu.memory_space<vmem>>, vector<1x8x128xf32>
    %138 = vector.shape_cast %137 : vector<1x8x128xf32> to vector<8x128xf32>
    %cst_43 = arith.constant dense<0.000000e+00> : vector<8x128xf32>
    %139 = tpu.matmul %135, %13, %cst_43 {dimension_numbers = #tpu.dot_dimension_numbers<[1], [0], [0], [1], [0, 0, 1, 1], [], []>} : vector<8x32xf32>, vector<32x128xf32>, vector<8x128xf32> -> vector<8x128xf32>
    %140 = arith.addf %138, %139 : vector<8x128xf32>
    %141 = vector.extract_strided_slice %140 {offsets = [0, 0], sizes = [8, 32], strides = [1, 1]} : vector<8x128xf32> to vector<8x32xf32>
    %142 = arith.negf %141 : vector<8x32xf32>
    %143 = math.exp %142 : vector<8x32xf32>
    %cst_44 = arith.constant 1.000000e+00 : f32
    %144 = vector.broadcast %cst_44 : f32 to vector<8x32xf32>
    %145 = arith.addf %144, %143 : vector<8x32xf32>
    %146 = arith.divf %144, %145 : vector<8x32xf32>
    %147 = vector.extract_strided_slice %140 {offsets = [0, 32], sizes = [8, 32], strides = [1, 1]} : vector<8x128xf32> to vector<8x32xf32>
    %148 = arith.negf %147 : vector<8x32xf32>
    %149 = math.exp %148 : vector<8x32xf32>
    %cst_45 = arith.constant 1.000000e+00 : f32
    %150 = vector.broadcast %cst_45 : f32 to vector<8x32xf32>
    %151 = arith.addf %150, %149 : vector<8x32xf32>
    %152 = arith.divf %150, %151 : vector<8x32xf32>
    %153 = vector.extract_strided_slice %140 {offsets = [0, 64], sizes = [8, 32], strides = [1, 1]} : vector<8x128xf32> to vector<8x32xf32>
    %154 = math.tanh %153 : vector<8x32xf32>
    %155 = vector.extract_strided_slice %140 {offsets = [0, 96], sizes = [8, 32], strides = [1, 1]} : vector<8x128xf32> to vector<8x32xf32>
    %156 = arith.negf %155 : vector<8x32xf32>
    %157 = math.exp %156 : vector<8x32xf32>
    %cst_46 = arith.constant 1.000000e+00 : f32
    %158 = vector.broadcast %cst_46 : f32 to vector<8x32xf32>
    %159 = arith.addf %158, %157 : vector<8x32xf32>
    %160 = arith.divf %158, %159 : vector<8x32xf32>
    %161 = arith.mulf %152, %133 : vector<8x32xf32>
    %162 = arith.mulf %146, %154 : vector<8x32xf32>
    %163 = arith.addf %161, %162 : vector<8x32xf32>
    %164 = math.tanh %163 : vector<8x32xf32>
    %165 = arith.mulf %160, %164 : vector<8x32xf32>
    %c5_i32 = arith.constant 5 : i32
    %166 = arith.index_cast %c5_i32 : i32 to index
    %c0_47 = arith.constant 0 : index
    %c0_48 = arith.constant 0 : index
    %167 = vector.load %arg9[%166, %c0_47, %c0_48] : memref<8x8x128xf32, #tpu.memory_space<vmem>>, vector<1x8x128xf32>
    %168 = vector.shape_cast %167 : vector<1x8x128xf32> to vector<8x128xf32>
    %cst_49 = arith.constant dense<0.000000e+00> : vector<8x128xf32>
    %169 = tpu.matmul %165, %13, %cst_49 {dimension_numbers = #tpu.dot_dimension_numbers<[1], [0], [0], [1], [0, 0, 1, 1], [], []>} : vector<8x32xf32>, vector<32x128xf32>, vector<8x128xf32> -> vector<8x128xf32>
    %170 = arith.addf %168, %169 : vector<8x128xf32>
    %171 = vector.extract_strided_slice %170 {offsets = [0, 0], sizes = [8, 32], strides = [1, 1]} : vector<8x128xf32> to vector<8x32xf32>
    %172 = arith.negf %171 : vector<8x32xf32>
    %173 = math.exp %172 : vector<8x32xf32>
    %cst_50 = arith.constant 1.000000e+00 : f32
    %174 = vector.broadcast %cst_50 : f32 to vector<8x32xf32>
    %175 = arith.addf %174, %173 : vector<8x32xf32>
    %176 = arith.divf %174, %175 : vector<8x32xf32>
    %177 = vector.extract_strided_slice %170 {offsets = [0, 32], sizes = [8, 32], strides = [1, 1]} : vector<8x128xf32> to vector<8x32xf32>
    %178 = arith.negf %177 : vector<8x32xf32>
    %179 = math.exp %178 : vector<8x32xf32>
    %cst_51 = arith.constant 1.000000e+00 : f32
    %180 = vector.broadcast %cst_51 : f32 to vector<8x32xf32>
    %181 = arith.addf %180, %179 : vector<8x32xf32>
    %182 = arith.divf %180, %181 : vector<8x32xf32>
    %183 = vector.extract_strided_slice %170 {offsets = [0, 64], sizes = [8, 32], strides = [1, 1]} : vector<8x128xf32> to vector<8x32xf32>
    %184 = math.tanh %183 : vector<8x32xf32>
    %185 = vector.extract_strided_slice %170 {offsets = [0, 96], sizes = [8, 32], strides = [1, 1]} : vector<8x128xf32> to vector<8x32xf32>
    %186 = arith.negf %185 : vector<8x32xf32>
    %187 = math.exp %186 : vector<8x32xf32>
    %cst_52 = arith.constant 1.000000e+00 : f32
    %188 = vector.broadcast %cst_52 : f32 to vector<8x32xf32>
    %189 = arith.addf %188, %187 : vector<8x32xf32>
    %190 = arith.divf %188, %189 : vector<8x32xf32>
    %191 = arith.mulf %182, %163 : vector<8x32xf32>
    %192 = arith.mulf %176, %184 : vector<8x32xf32>
    %193 = arith.addf %191, %192 : vector<8x32xf32>
    %194 = math.tanh %193 : vector<8x32xf32>
    %195 = arith.mulf %190, %194 : vector<8x32xf32>
    %c6_i32 = arith.constant 6 : i32
    %196 = arith.index_cast %c6_i32 : i32 to index
    %c0_53 = arith.constant 0 : index
    %c0_54 = arith.constant 0 : index
    %197 = vector.load %arg9[%196, %c0_53, %c0_54] : memref<8x8x128xf32, #tpu.memory_space<vmem>>, vector<1x8x128xf32>
    %198 = vector.shape_cast %197 : vector<1x8x128xf32> to vector<8x128xf32>
    %cst_55 = arith.constant dense<0.000000e+00> : vector<8x128xf32>
    %199 = tpu.matmul %195, %13, %cst_55 {dimension_numbers = #tpu.dot_dimension_numbers<[1], [0], [0], [1], [0, 0, 1, 1], [], []>} : vector<8x32xf32>, vector<32x128xf32>, vector<8x128xf32> -> vector<8x128xf32>
    %200 = arith.addf %198, %199 : vector<8x128xf32>
    %201 = vector.extract_strided_slice %200 {offsets = [0, 0], sizes = [8, 32], strides = [1, 1]} : vector<8x128xf32> to vector<8x32xf32>
    %202 = arith.negf %201 : vector<8x32xf32>
    %203 = math.exp %202 : vector<8x32xf32>
    %cst_56 = arith.constant 1.000000e+00 : f32
    %204 = vector.broadcast %cst_56 : f32 to vector<8x32xf32>
    %205 = arith.addf %204, %203 : vector<8x32xf32>
    %206 = arith.divf %204, %205 : vector<8x32xf32>
    %207 = vector.extract_strided_slice %200 {offsets = [0, 32], sizes = [8, 32], strides = [1, 1]} : vector<8x128xf32> to vector<8x32xf32>
    %208 = arith.negf %207 : vector<8x32xf32>
    %209 = math.exp %208 : vector<8x32xf32>
    %cst_57 = arith.constant 1.000000e+00 : f32
    %210 = vector.broadcast %cst_57 : f32 to vector<8x32xf32>
    %211 = arith.addf %210, %209 : vector<8x32xf32>
    %212 = arith.divf %210, %211 : vector<8x32xf32>
    %213 = vector.extract_strided_slice %200 {offsets = [0, 64], sizes = [8, 32], strides = [1, 1]} : vector<8x128xf32> to vector<8x32xf32>
    %214 = math.tanh %213 : vector<8x32xf32>
    %215 = vector.extract_strided_slice %200 {offsets = [0, 96], sizes = [8, 32], strides = [1, 1]} : vector<8x128xf32> to vector<8x32xf32>
    %216 = arith.negf %215 : vector<8x32xf32>
    %217 = math.exp %216 : vector<8x32xf32>
    %cst_58 = arith.constant 1.000000e+00 : f32
    %218 = vector.broadcast %cst_58 : f32 to vector<8x32xf32>
    %219 = arith.addf %218, %217 : vector<8x32xf32>
    %220 = arith.divf %218, %219 : vector<8x32xf32>
    %221 = arith.mulf %212, %193 : vector<8x32xf32>
    %222 = arith.mulf %206, %214 : vector<8x32xf32>
    %223 = arith.addf %221, %222 : vector<8x32xf32>
    %224 = math.tanh %223 : vector<8x32xf32>
    %225 = arith.mulf %220, %224 : vector<8x32xf32>
    %c7_i32 = arith.constant 7 : i32
    %226 = arith.index_cast %c7_i32 : i32 to index
    %c0_59 = arith.constant 0 : index
    %c0_60 = arith.constant 0 : index
    %227 = vector.load %arg9[%226, %c0_59, %c0_60] : memref<8x8x128xf32, #tpu.memory_space<vmem>>, vector<1x8x128xf32>
    %228 = vector.shape_cast %227 : vector<1x8x128xf32> to vector<8x128xf32>
    %cst_61 = arith.constant dense<0.000000e+00> : vector<8x128xf32>
    %229 = tpu.matmul %225, %13, %cst_61 {dimension_numbers = #tpu.dot_dimension_numbers<[1], [0], [0], [1], [0, 0, 1, 1], [], []>} : vector<8x32xf32>, vector<32x128xf32>, vector<8x128xf32> -> vector<8x128xf32>
    %230 = arith.addf %228, %229 : vector<8x128xf32>
    %231 = vector.extract_strided_slice %230 {offsets = [0, 0], sizes = [8, 32], strides = [1, 1]} : vector<8x128xf32> to vector<8x32xf32>
    %232 = arith.negf %231 : vector<8x32xf32>
    %233 = math.exp %232 : vector<8x32xf32>
    %cst_62 = arith.constant 1.000000e+00 : f32
    %234 = vector.broadcast %cst_62 : f32 to vector<8x32xf32>
    %235 = arith.addf %234, %233 : vector<8x32xf32>
    %236 = arith.divf %234, %235 : vector<8x32xf32>
    %237 = vector.extract_strided_slice %230 {offsets = [0, 32], sizes = [8, 32], strides = [1, 1]} : vector<8x128xf32> to vector<8x32xf32>
    %238 = arith.negf %237 : vector<8x32xf32>
    %239 = math.exp %238 : vector<8x32xf32>
    %cst_63 = arith.constant 1.000000e+00 : f32
    %240 = vector.broadcast %cst_63 : f32 to vector<8x32xf32>
    %241 = arith.addf %240, %239 : vector<8x32xf32>
    %242 = arith.divf %240, %241 : vector<8x32xf32>
    %243 = vector.extract_strided_slice %230 {offsets = [0, 64], sizes = [8, 32], strides = [1, 1]} : vector<8x128xf32> to vector<8x32xf32>
    %244 = math.tanh %243 : vector<8x32xf32>
    %245 = vector.extract_strided_slice %230 {offsets = [0, 96], sizes = [8, 32], strides = [1, 1]} : vector<8x128xf32> to vector<8x32xf32>
    %246 = arith.negf %245 : vector<8x32xf32>
    %247 = math.exp %246 : vector<8x32xf32>
    %cst_64 = arith.constant 1.000000e+00 : f32
    %248 = vector.broadcast %cst_64 : f32 to vector<8x32xf32>
    %249 = arith.addf %248, %247 : vector<8x32xf32>
    %250 = arith.divf %248, %249 : vector<8x32xf32>
    %251 = arith.mulf %242, %223 : vector<8x32xf32>
    %252 = arith.mulf %236, %244 : vector<8x32xf32>
    %253 = arith.addf %251, %252 : vector<8x32xf32>
    %254 = math.tanh %253 : vector<8x32xf32>
    %255 = arith.mulf %250, %254 : vector<8x32xf32>
    %c8_i32 = arith.constant 8 : i32
    %c0_65 = arith.constant 0 : index
    %c0_66 = arith.constant 0 : index
    %256 = vector.load %arg10[%c0_65, %c0_66] : memref<8x32xf32, #tpu.memory_space<vmem>>, vector<8x32xf32>
    tpu.vector_store %arg10[%c0_65, %c0_66], %255 {strides = array<i32>} : memref<8x32xf32, #tpu.memory_space<vmem>>, vector<8x32xf32>,
    %c0_67 = arith.constant 0 : index
    %c0_68 = arith.constant 0 : index
    %257 = vector.load %arg11[%c0_67, %c0_68] : memref<8x32xf32, #tpu.memory_space<vmem>>, vector<8x32xf32>
    tpu.vector_store %arg11[%c0_67, %c0_68], %253 {strides = array<i32>} : memref<8x32xf32, #tpu.memory_space<vmem>>, vector<8x32xf32>,
    %c0_i32_69 = arith.constant 0 : i32
    %258 = arith.cmpi eq, %arg1, %c0_i32_69 : i32
    %259 = arith.extui %258 : i1 to i32
    %c0_i32_70 = arith.constant 0 : i32
    %260 = arith.cmpi ne, %259, %c0_i32_70 : i32
    scf.if %260 {
      %c0_71 = arith.constant 0 : index
      %c0_72 = arith.constant 0 : index
      %261 = vector.load %arg6[%c0_71, %c0_72] : memref<32x1xf32, #tpu.memory_space<vmem>>, vector<32x1xf32>
      %cst_73 = arith.constant dense<0.000000e+00> : vector<8x1xf32>
      %262 = tpu.matmul %255, %261, %cst_73 {dimension_numbers = #tpu.dot_dimension_numbers<[1], [0], [0], [1], [0, 0, 1, 1], [], []>} : vector<8x32xf32>, vector<32x1xf32>, vector<8x1xf32> -> vector<8x1xf32>
      %c0_74 = arith.constant 0 : index
      %c0_75 = arith.constant 0 : index
      %263 = vector.load %arg7[%c0_74, %c0_75] : memref<1x1xf32, #tpu.memory_space<vmem>>, vector<1x1xf32>
      %264 = vector.broadcast %263 : vector<1x1xf32> to vector<8x1xf32>
      %265 = arith.addf %262, %264 : vector<8x1xf32>
      %c0_76 = arith.constant 0 : index
      %c0_77 = arith.constant 0 : index
      %266 = vector.load %arg8[%c0_76, %c0_77] : memref<8x1xf32, #tpu.memory_space<vmem>>, vector<8x1xf32>
      tpu.vector_store %arg8[%c0_76, %c0_77], %265 {strides = array<i32>} : memref<8x1xf32, #tpu.memory_space<vmem>>, vector<8x1xf32>,
    } else {
    }
    return
  }
  func.func @transform_0(%arg0: i32, %arg1: i32) -> (i32, i32, i32) {
    %c0_i32 = arith.constant 0 : i32
    %c0_i32_0 = arith.constant 0 : i32
    return %arg1, %arg0, %c0_i32 : i32, i32, i32
  }
  func.func @transform_1(%arg0: i32, %arg1: i32) -> (i32, i32) {
    %c0_i32 = arith.constant 0 : i32
    %c0_i32_0 = arith.constant 0 : i32
    %c0_i32_1 = arith.constant 0 : i32
    return %c0_i32, %c0_i32_0 : i32, i32
  }
  func.func @transform_2(%arg0: i32, %arg1: i32) -> (i32, i32) {
    %c0_i32 = arith.constant 0 : i32
    %c0_i32_0 = arith.constant 0 : i32
    %c0_i32_1 = arith.constant 0 : i32
    return %c0_i32, %c0_i32_0 : i32, i32
  }
  func.func @transform_3(%arg0: i32, %arg1: i32) -> (i32, i32) {
    %c0_i32 = arith.constant 0 : i32
    %c0_i32_0 = arith.constant 0 : i32
    %c0_i32_1 = arith.constant 0 : i32
    return %c0_i32, %c0_i32_0 : i32, i32
  }
  func.func @transform_4(%arg0: i32, %arg1: i32) -> (i32, i32) {
    %c0_i32 = arith.constant 0 : i32
    %c0_i32_0 = arith.constant 0 : i32
    %c0_i32_1 = arith.constant 0 : i32
    return %c0_i32, %c0_i32_0 : i32, i32
  }
  func.func @transform_5(%arg0: i32, %arg1: i32) -> (i32, i32) {
    %c0_i32 = arith.constant 0 : i32
    %c0_i32_0 = arith.constant 0 : i32
    %c0_i32_1 = arith.constant 0 : i32
    return %c0_i32, %c0_i32_0 : i32, i32
  }
  func.func @transform_6(%arg0: i32, %arg1: i32) -> (i32, i32) {
    %c0_i32 = arith.constant 0 : i32
    %c0_i32_0 = arith.constant 0 : i32
    return %arg0, %c0_i32 : i32, i32
  }
}

</mosaic_0001>

<llo_original>
// kernel: tpu_custom_call.1
$region0: #{tpu_custom_call.1}
  #allocation0 [shape = 'u32[]', space=smem, size = 0x4, offset = 0x4, fixed_abs, tag = 'smem constant byte address 0x4 - core index']
  #allocation1 [shape = 'u32[72,128]{1,0:T(1,128)}', space=vmem, size = 0x9000, scoped, tag = 'internal scratch']
  #allocation2 [shape = 'f32[8,8,128]{2,1,0:T(8,128)}', space=vmem, size = 0x8000, scoped, tag = 'scratch operand']
  #allocation3 [shape = 'f32[8,32]{1,0:T(8,128)}', space=vmem, size = 0x1000, scoped, tag = 'scratch operand']
  #allocation4 [shape = 'f32[8,32]{1,0:T(8,128)}', space=vmem, size = 0x1000, scoped, tag = 'scratch operand']
  #allocation5 [shape = 'f32[1,1]{1,0:T(1,128)S(1)}', space=vmem, size = 0x200, scoped, tag = 'scoped memory for tpu_custom_call.1']
  %s0 = inlined_call_operand.hbm [shape: f32[8,8,16], index: 0, kind: input, shape index: {}]
  %s1 = inlined_call_operand.hbm [shape: f32[16,128], index: 1, kind: input, shape index: {}]
  %s2 = inlined_call_operand.vmem [shape: f32[32,128], index: 2, kind: input, shape index: {}]
  %s3 = inlined_call_operand.vmem [shape: f32[1,128], index: 3, kind: input, shape index: {}]
  %s4 = inlined_call_operand.vmem [shape: f32[32,1], index: 4, kind: input, shape index: {}]
  %s5 = inlined_call_operand.<no memory space> [shape: f32[1,1], index: 5, kind: input, shape index: {}]
  %s6 = inlined_call_operand.vmem [shape: f32[8,1], index: 6, kind: output, shape index: {}]
  %s7 = sld [smem:[#allocation0]]
  $region50: #{tpu_custom_call.1} parent=0
    _
  %s9 = ssub.s32 1, %s7
  %s10 = scalar_select 0, %s9, %s7
  %v11 = vstv %s5
  %12 = vst [vmem:[#allocation5] sm:$0x1] %v11
  $region1: #{tpu_custom_call.1} parent=0
    #allocation6 [shape = 'u8[32768]{0}', space=vmem, size = 0x8000, scoped, tag = 'input window, operand 0, single buffered']
    #allocation7 [shape = 's32[1]{0}', space=sflag, size = 0x4, scoped, tag = 'scoped memory for tpu_custom_call.1']
    #allocation8 [shape = 'u8[8192]{0}', space=vmem, size = 0x2000, scoped, tag = 'input window, operand 1, single buffered']
    #allocation9 [shape = 's32[1]{0}', space=sflag, size = 0x4, scoped, tag = 'scoped memory for tpu_custom_call.1']
    %13 = vsyncpa [#allocation7], 0
    %14 = vsyncpa [#allocation9], 0
    // Predicated region
    $region2: #{tpu_custom_call.1} parent=1 // pred_check
      _
    $region3: #{tpu_custom_call.1} parent=1 // pred_check_branch
      %16 = sbr.rel (0) target = $region5
    $region4: #{tpu_custom_call.1} parent=1 // pred_region
      %18 = vsyncadd [#allocation7], 0
      %s19 = sshll.u32 %s0, 4
      %s20 = int_to_ptr.hbm [resolvable:$true] %s19
      %s21 = sshll.u32 [#allocation6], 4
      %s22 = int_to_ptr.vmem [resolvable:$true] %s21
      %27 = dma.hbm_to_vmem [thread:$0]  %s20, 1024, %s22, [#allocation7], 128, 128, 8
    $region5: #{tpu_custom_call.1} parent=1 // pred_fallthru
      _
    // Predicated region
    $region6: #{tpu_custom_call.1} parent=1 // pred_check
      _
    $region7: #{tpu_custom_call.1} parent=1 // pred_check_branch
      %29 = sbr.rel (0) target = $region9
    $region8: #{tpu_custom_call.1} parent=1 // pred_region
      %31 = vsyncadd [#allocation9], 0
      %s32 = sshll.u32 %s1, 4
      %s33 = int_to_ptr.hbm [resolvable:$true] %s32
      %s34 = sshll.u32 [#allocation8], 4
      %s35 = int_to_ptr.vmem [resolvable:$true] %s34
      %40 = dma.hbm_to_vmem [thread:$0]  %s33, 256, %s35, [#allocation9], 128, 128, 8
    $region9: #{tpu_custom_call.1} parent=1 // pred_fallthru
      _
    // Predicated region
    $region10: #{tpu_custom_call.1} parent=1 // pred_check
      _
    $region11: #{tpu_custom_call.1} parent=1 // pred_check_branch
      %42 = sbr.rel (0) target = $region13
    $region12: #{tpu_custom_call.1} parent=1 // pred_region
      _
    $region13: #{tpu_custom_call.1} parent=1 // pred_fallthru
      _
    // Predicated region
    $region14: #{tpu_custom_call.1} parent=1 // pred_check
      _
    $region15: #{tpu_custom_call.1} parent=1 // pred_check_branch
      %44 = sbr.rel (0) target = $region17
    $region16: #{tpu_custom_call.1} parent=1 // pred_region
      _
    $region17: #{tpu_custom_call.1} parent=1 // pred_fallthru
      _
    // Predicated region
    $region18: #{tpu_custom_call.1} parent=1 // pred_check
      _
    $region19: #{tpu_custom_call.1} parent=1 // pred_check_branch
      %46 = sbr.rel (0) target = $region21
    $region20: #{tpu_custom_call.1} parent=1 // pred_region
      _
    $region21: #{tpu_custom_call.1} parent=1 // pred_fallthru
      _
    // Predicated region
    $region22: #{tpu_custom_call.1} parent=1 // pred_check
      _
    $region23: #{tpu_custom_call.1} parent=1 // pred_check_branch
      %48 = sbr.rel (0) target = $region25
    $region24: #{tpu_custom_call.1} parent=1 // pred_region
      _
    $region25: #{tpu_custom_call.1} parent=1 // pred_fallthru
      _
    // Predicated region
    $region26: #{tpu_custom_call.1} parent=1 // pred_check
      _
    $region27: #{tpu_custom_call.1} parent=1 // pred_check_branch
      %50 = sbr.rel (0) target = $region29
    $region28: #{tpu_custom_call.1} parent=1 // pred_region
      %52 = dma.done [#allocation7], 1024
    $region29: #{tpu_custom_call.1} parent=1 // pred_fallthru
      _
    // Predicated region
    $region30: #{tpu_custom_call.1} parent=1 // pred_check
      _
    $region31: #{tpu_custom_call.1} parent=1 // pred_check_branch
      %54 = sbr.rel (0) target = $region33
    $region32: #{tpu_custom_call.1} parent=1 // pred_region
      %56 = dma.done [#allocation9], 256
    $region33: #{tpu_custom_call.1} parent=1 // pred_fallthru
      _
    %p57 = scmp.eq.s32.totalorder 0, 0
    // Predicated region
    $region34: #{tpu_custom_call.1} parent=1 // pred_check
      %p58 = pneg %p57
    $region35: #{tpu_custom_call.1} parent=1 // pred_check_branch
      %60 = sbr.rel (%p58) target = $region37
    $region36: #{tpu_custom_call.1} parent=1 // pred_region
      %vm61 = vcmask 261120
      %62 = vst.msk [vmem:[#allocation3] sm:$0xff] %vm61, 0.0
      %63 = vst.msk [vmem:[#allocation4] sm:$0xff] %vm61, 0.0
    $region37: #{tpu_custom_call.1} parent=1 // pred_fallthru
      _
    %v64 = vld [vmem:[#allocation6] sm:$0xff]
    %v65 = vld [vmem:[#allocation6 + $0x8] sm:$0xff]
    %v66 = vld [vmem:[#allocation6 + $0x10] sm:$0xff]
    %v67 = vld [vmem:[#allocation6 + $0x18] sm:$0xff]
    %v68 = vld [vmem:[#allocation6 + $0x20] sm:$0xff]
    %v69 = vld [vmem:[#allocation6 + $0x28] sm:$0xff]
    %v70 = vld [vmem:[#allocation6 + $0x30] sm:$0xff]
    %v71 = vld [vmem:[#allocation6 + $0x38] sm:$0xff]
    %v72 = vld [vmem:[#allocation8] sm:$0xff]
    %v73 = vld [vmem:[#allocation8 + $0x8] sm:$0xff]
    %vm74 = vcmask 130048
    %v76 = vsel %vm74, %v64, 0
    %v79 = vsel %vm74, %v65, 0
    %v82 = vsel %vm74, %v66, 0
    %v85 = vsel %vm74, %v67, 0
    %v88 = vsel %vm74, %v68, 0
    %v91 = vsel %vm74, %v69, 0
    %v94 = vsel %vm74, %v70, 0
    %v97 = vsel %vm74, %v71, 0
    %99 = vmatpush.msra.mxu0 0.0
    %100 = vmatpush.msra.mxu0 0.0
    %101 = vmatpush.msra.mxu0 0.0
    %102 = vmatpush.msra.mxu0 0.0
    %103 = vmatpush.msra.mxu0 0.0
    %104 = vmatpush.msra.mxu0 0.0
    %105 = vmatpush.msra.mxu0 0.0
    %106 = vmatpush.msra.mxu0 0.0
    %107 = vmatpush.msra.mxu0 0.0
    %108 = vmatpush.msra.mxu0 0.0
    %109 = vmatpush.msra.mxu0 0.0
    %110 = vmatpush.msra.mxu0 0.0
    %111 = vmatpush.msra.mxu0 0.0
    %112 = vmatpush.msra.mxu0 0.0
    %113 = vmatpush.msra.mxu0 %v73
    %114 = vmatpush.msra.mxu0 %v72
    %115 = vmatmul.f32.gmra.mxu0 %v76
    %v116 = vpop.f32.mrf.mxu0
    %v117 = vadd.f32 0.0, %v116
    %118 = vmatmul.f32.gmra.mxu0 %v79
    %v119 = vpop.f32.mrf.mxu0
    %v120 = vadd.f32 0.0, %v119
    %121 = vmatmul.f32.gmra.mxu0 %v82
    %v122 = vpop.f32.mrf.mxu0
    %v123 = vadd.f32 0.0, %v122
    %124 = vmatmul.f32.gmra.mxu0 %v85
    %v125 = vpop.f32.mrf.mxu0
    %v126 = vadd.f32 0.0, %v125
    %127 = vmatmul.f32.gmra.mxu0 %v88
    %v128 = vpop.f32.mrf.mxu0
    %v129 = vadd.f32 0.0, %v128
    %130 = vmatmul.f32.gmra.mxu0 %v91
    %v131 = vpop.f32.mrf.mxu0
    %v132 = vadd.f32 0.0, %v131
    %133 = vmatmul.f32.gmra.mxu0 %v94
    %v134 = vpop.f32.mrf.mxu0
    %v135 = vadd.f32 0.0, %v134
    %136 = vmatmul.f32.gmra.mxu0 %v97
    %v137 = vpop.f32.mrf.mxu0
    %v138 = vadd.f32 0.0, %v137
    %139 = vdwg.mxu0
    %v140 = vld [vmem:[%s3] sm:$0x1]
    %v142 = vperm.slane %v140, 0
    %v144 = vadd.f32 %v117, %v142
    %v145 = vadd.f32 %v120, %v142
    %v146 = vadd.f32 %v123, %v142
    %v147 = vadd.f32 %v126, %v142
    %v148 = vadd.f32 %v129, %v142
    %v149 = vadd.f32 %v132, %v142
    %v150 = vadd.f32 %v135, %v142
    %v151 = vadd.f32 %v138, %v142
    %152 = vst [vmem:[#allocation2] sm:$0xff] %v144
    %153 = vst [vmem:[#allocation2 + $0x8] sm:$0xff] %v145
    %154 = vst [vmem:[#allocation2 + $0x10] sm:$0xff] %v146
    %155 = vst [vmem:[#allocation2 + $0x18] sm:$0xff] %v147
    %156 = vst [vmem:[#allocation2 + $0x20] sm:$0xff] %v148
    %157 = vst [vmem:[#allocation2 + $0x28] sm:$0xff] %v149
    %158 = vst [vmem:[#allocation2 + $0x30] sm:$0xff] %v150
    %159 = vst [vmem:[#allocation2 + $0x38] sm:$0xff] %v151
    %v160 = vld [vmem:[%s2] sm:$0xff]
    %v161 = vld [vmem:[%s2 + $0x8] sm:$0xff]
    %v162 = vld [vmem:[%s2 + $0x10] sm:$0xff]
    %v163 = vld [vmem:[%s2 + $0x18] sm:$0xff]
    %v164 = vld [vmem:[#allocation3] sm:$0xff]
    %v165 = vld [vmem:[#allocation4] sm:$0xff]
    %v166 = vld [vmem:[#allocation2] sm:$0xff]
    %vm167 = vcmask 261120
    %v169 = vsel %vm167, %v164, 0
    %171 = vmatpush.msra.mxu0 0.0
    %172 = vmatpush.msra.mxu0 0.0
    %173 = vmatpush.msra.mxu0 0.0
    %174 = vmatpush.msra.mxu0 0.0
    %175 = vmatpush.msra.mxu0 0.0
    %176 = vmatpush.msra.mxu0 0.0
    %177 = vmatpush.msra.mxu0 0.0
    %178 = vmatpush.msra.mxu0 0.0
    %179 = vmatpush.msra.mxu0 0.0
    %180 = vmatpush.msra.mxu0 0.0
    %181 = vmatpush.msra.mxu0 0.0
    %182 = vmatpush.msra.mxu0 0.0
    %183 = vmatpush.msra.mxu0 %v163
    %184 = vmatpush.msra.mxu0 %v162
    %185 = vmatpush.msra.mxu0 %v161
    %186 = vmatpush.msra.mxu0 %v160
    %187 = vmatmul.f32.gmra.mxu0 %v169
    %v188 = vpop.f32.mrf.mxu0
    %v189 = vadd.f32 0.0, %v188
    %190 = vdwg.mxu0
    %v191 = vadd.f32 %v166, %v189
    %v192 = vxor.u32 %v191, 2147483648
    %v193 = vmul.f32 %v192, 1.442695
    %v194 = vpow.pop %v193
    %v195 = vadd.f32 %v194, 1.0
    %v196 = vrcp.pop %v195
    %v197 = vmul.f32 %v195, %v196
    %v198 = vsub.f32 1.0, %v197
    %v199 = vmul.f32 %v196, %v198
    %v200 = vadd.f32 %v196, %v199
    %vm201 = vweird.f32 %v195
    %vm202 = vweird.f32 %v196
    %vm203 = vmor %vm201, %vm202
    %v204 = vsel %vm203, %v196, %v200
    %v205 = vand.u32 2147483647, %v195
    %vm206 = vcmp.eq.f32.partialorder %v205, 8.507059e+37
    %v207 = vand.u32 %v195, 2147483648
    %v208 = vor.u32 1.1754944e-38, %v207
    %v209 = vsel %vm206, %v208, %v204
    %v210 = vmul.f32 1.0, %v209
    %v211 = vtanh.pop %v191
    %213 = vrot.lane.b32.xlu0 %v165, 32
    %v214 = vpop.permute.xlu0 %213
    %v216 = vmul.f32 %v210, %v214
    %218 = vrot.lane.b32.xlu0 %v211, 64
    %v219 = vpop.permute.xlu0 %218
    %v221 = vmul.f32 %v210, %v219
    %223 = vrot.lane.b32.xlu0 %v221, 32
    %v224 = vpop.permute.xlu0 %223
    %v226 = vadd.f32 %v216, %v224
    %v227 = vtanh.pop %v226
    %229 = vrot.lane.b32.xlu0 %v227, 64
    %v230 = vpop.permute.xlu0 %229
    %v232 = vmul.f32 %v210, %v230
    %s233 = scalar_lea.vmem [#allocation2], 8
    %v234 = vld [vmem:[%s233] sm:$0xff]
    %236 = vrot.lane.b32.xlu0 %v232, 32
    %v237 = vpop.permute.xlu0 %236
    %v238 = vsel %vm167, %v237, 0
    %240 = vmatpush.msra.mxu0 0.0
    %241 = vmatpush.msra.mxu0 0.0
    %242 = vmatpush.msra.mxu0 0.0
    %243 = vmatpush.msra.mxu0 0.0
    %244 = vmatpush.msra.mxu0 0.0
    %245 = vmatpush.msra.mxu0 0.0
    %246 = vmatpush.msra.mxu0 0.0
    %247 = vmatpush.msra.mxu0 0.0
    %248 = vmatpush.msra.mxu0 0.0
    %249 = vmatpush.msra.mxu0 0.0
    %250 = vmatpush.msra.mxu0 0.0
    %251 = vmatpush.msra.mxu0 0.0
    %252 = vmatpush.msra.mxu0 %v163
    %253 = vmatpush.msra.mxu0 %v162
    %254 = vmatpush.msra.mxu0 %v161
    %255 = vmatpush.msra.mxu0 %v160
    %256 = vmatmul.f32.gmra.mxu0 %v238
    %v257 = vpop.f32.mrf.mxu0
    %v258 = vadd.f32 0.0, %v257
    %259 = vdwg.mxu0
    %v260 = vadd.f32 %v234, %v258
    %v261 = vxor.u32 %v260, 2147483648
    %v262 = vmul.f32 %v261, 1.442695
    %v263 = vpow.pop %v262
    %v264 = vadd.f32 %v263, 1.0
    %v265 = vrcp.pop %v264
    %v266 = vmul.f32 %v264, %v265
    %v267 = vsub.f32 1.0, %v266
    %v268 = vmul.f32 %v265, %v267
    %v269 = vadd.f32 %v265, %v268
    %vm270 = vweird.f32 %v264
    %vm271 = vweird.f32 %v265
    %vm272 = vmor %vm270, %vm271
    %v273 = vsel %vm272, %v265, %v269
    %v274 = vand.u32 2147483647, %v264
    %vm275 = vcmp.eq.f32.partialorder %v274, 8.507059e+37
    %v276 = vand.u32 %v264, 2147483648
    %v277 = vor.u32 1.1754944e-38, %v276
    %v278 = vsel %vm275, %v277, %v273
    %v279 = vmul.f32 1.0, %v278
    %v280 = vtanh.pop %v260
    %v281 = vmul.f32 %v279, %v226
    %283 = vrot.lane.b32.xlu0 %v280, 64
    %v284 = vpop.permute.xlu0 %283
    %v286 = vmul.f32 %v279, %v284
    %288 = vrot.lane.b32.xlu0 %v286, 32
    %v289 = vpop.permute.xlu0 %288
    %v291 = vadd.f32 %v281, %v289
    %v292 = vtanh.pop %v291
    %294 = vrot.lane.b32.xlu0 %v292, 64
    %v295 = vpop.permute.xlu0 %294
    %v297 = vmul.f32 %v279, %v295
    %s298 = scalar_lea.vmem [#allocation2], 16
    %v299 = vld [vmem:[%s298] sm:$0xff]
    %301 = vrot.lane.b32.xlu0 %v297, 32
    %v302 = vpop.permute.xlu0 %301
    %v303 = vsel %vm167, %v302, 0
    %305 = vmatpush.msra.mxu0 0.0
    %306 = vmatpush.msra.mxu0 0.0
    %307 = vmatpush.msra.mxu0 0.0
    %308 = vmatpush.msra.mxu0 0.0
    %309 = vmatpush.msra.mxu0 0.0
    %310 = vmatpush.msra.mxu0 0.0
    %311 = vmatpush.msra.mxu0 0.0
    %312 = vmatpush.msra.mxu0 0.0
    %313 = vmatpush.msra.mxu0 0.0
    %314 = vmatpush.msra.mxu0 0.0
    %315 = vmatpush.msra.mxu0 0.0
    %316 = vmatpush.msra.mxu0 0.0
    %317 = vmatpush.msra.mxu0 %v163
    %318 = vmatpush.msra.mxu0 %v162
    %319 = vmatpush.msra.mxu0 %v161
    %320 = vmatpush.msra.mxu0 %v160
    %321 = vmatmul.f32.gmra.mxu0 %v303
    %v322 = vpop.f32.mrf.mxu0
    %v323 = vadd.f32 0.0, %v322
    %324 = vdwg.mxu0
    %v325 = vadd.f32 %v299, %v323
    %v326 = vxor.u32 %v325, 2147483648
    %v327 = vmul.f32 %v326, 1.442695
    %v328 = vpow.pop %v327
    %v329 = vadd.f32 %v328, 1.0
    %v330 = vrcp.pop %v329
    %v331 = vmul.f32 %v329, %v330
    %v332 = vsub.f32 1.0, %v331
    %v333 = vmul.f32 %v330, %v332
    %v334 = vadd.f32 %v330, %v333
    %vm335 = vweird.f32 %v329
    %vm336 = vweird.f32 %v330
    %vm337 = vmor %vm335, %vm336
    %v338 = vsel %vm337, %v330, %v334
    %v339 = vand.u32 2147483647, %v329
    %vm340 = vcmp.eq.f32.partialorder %v339, 8.507059e+37
    %v341 = vand.u32 %v329, 2147483648
    %v342 = vor.u32 1.1754944e-38, %v341
    %v343 = vsel %vm340, %v342, %v338
    %v344 = vmul.f32 1.0, %v343
    %v345 = vtanh.pop %v325
    %v346 = vmul.f32 %v344, %v291
    %348 = vrot.lane.b32.xlu0 %v345, 64
    %v349 = vpop.permute.xlu0 %348
    %v351 = vmul.f32 %v344, %v349
    %353 = vrot.lane.b32.xlu0 %v351, 32
    %v354 = vpop.permute.xlu0 %353
    %v356 = vadd.f32 %v346, %v354
    %v357 = vtanh.pop %v356
    %359 = vrot.lane.b32.xlu0 %v357, 64
    %v360 = vpop.permute.xlu0 %359
    %v362 = vmul.f32 %v344, %v360
    %s363 = scalar_lea.vmem [#allocation2], 24
    %v364 = vld [vmem:[%s363] sm:$0xff]
    %366 = vrot.lane.b32.xlu0 %v362, 32
    %v367 = vpop.permute.xlu0 %366
    %v368 = vsel %vm167, %v367, 0
    %370 = vmatpush.msra.mxu0 0.0
    %371 = vmatpush.msra.mxu0 0.0
    %372 = vmatpush.msra.mxu0 0.0
    %373 = vmatpush.msra.mxu0 0.0
    %374 = vmatpush.msra.mxu0 0.0
    %375 = vmatpush.msra.mxu0 0.0
    %376 = vmatpush.msra.mxu0 0.0
    %377 = vmatpush.msra.mxu0 0.0
    %378 = vmatpush.msra.mxu0 0.0
    %379 = vmatpush.msra.mxu0 0.0
    %380 = vmatpush.msra.mxu0 0.0
    %381 = vmatpush.msra.mxu0 0.0
    %382 = vmatpush.msra.mxu0 %v163
    %383 = vmatpush.msra.mxu0 %v162
    %384 = vmatpush.msra.mxu0 %v161
    %385 = vmatpush.msra.mxu0 %v160
    %386 = vmatmul.f32.gmra.mxu0 %v368
    %v387 = vpop.f32.mrf.mxu0
    %v388 = vadd.f32 0.0, %v387
    %389 = vdwg.mxu0
    %v390 = vadd.f32 %v364, %v388
    %v391 = vxor.u32 %v390, 2147483648
    %v392 = vmul.f32 %v391, 1.442695
    %v393 = vpow.pop %v392
    %v394 = vadd.f32 %v393, 1.0
    %v395 = vrcp.pop %v394
    %v396 = vmul.f32 %v394, %v395
    %v397 = vsub.f32 1.0, %v396
    %v398 = vmul.f32 %v395, %v397
    %v399 = vadd.f32 %v395, %v398
    %vm400 = vweird.f32 %v394
    %vm401 = vweird.f32 %v395
    %vm402 = vmor %vm400, %vm401
    %v403 = vsel %vm402, %v395, %v399
    %v404 = vand.u32 2147483647, %v394
    %vm405 = vcmp.eq.f32.partialorder %v404, 8.507059e+37
    %v406 = vand.u32 %v394, 2147483648
    %v407 = vor.u32 1.1754944e-38, %v406
    %v408 = vsel %vm405, %v407, %v403
    %v409 = vmul.f32 1.0, %v408
    %v410 = vtanh.pop %v390
    %v411 = vmul.f32 %v409, %v356
    %413 = vrot.lane.b32.xlu0 %v410, 64
    %v414 = vpop.permute.xlu0 %413
    %v416 = vmul.f32 %v409, %v414
    %418 = vrot.lane.b32.xlu0 %v416, 32
    %v419 = vpop.permute.xlu0 %418
    %v421 = vadd.f32 %v411, %v419
    %v422 = vtanh.pop %v421
    %424 = vrot.lane.b32.xlu0 %v422, 64
    %v425 = vpop.permute.xlu0 %424
    %v427 = vmul.f32 %v409, %v425
    %s428 = scalar_lea.vmem [#allocation2], 32
    %v429 = vld [vmem:[%s428] sm:$0xff]
    %431 = vrot.lane.b32.xlu0 %v427, 32
    %v432 = vpop.permute.xlu0 %431
    %v433 = vsel %vm167, %v432, 0
    %435 = vmatpush.msra.mxu0 0.0
    %436 = vmatpush.msra.mxu0 0.0
    %437 = vmatpush.msra.mxu0 0.0
    %438 = vmatpush.msra.mxu0 0.0
    %439 = vmatpush.msra.mxu0 0.0
    %440 = vmatpush.msra.mxu0 0.0
    %441 = vmatpush.msra.mxu0 0.0
    %442 = vmatpush.msra.mxu0 0.0
    %443 = vmatpush.msra.mxu0 0.0
    %444 = vmatpush.msra.mxu0 0.0
    %445 = vmatpush.msra.mxu0 0.0
    %446 = vmatpush.msra.mxu0 0.0
    %447 = vmatpush.msra.mxu0 %v163
    %448 = vmatpush.msra.mxu0 %v162
    %449 = vmatpush.msra.mxu0 %v161
    %450 = vmatpush.msra.mxu0 %v160
    %451 = vmatmul.f32.gmra.mxu0 %v433
    %v452 = vpop.f32.mrf.mxu0
    %v453 = vadd.f32 0.0, %v452
    %454 = vdwg.mxu0
    %v455 = vadd.f32 %v429, %v453
    %v456 = vxor.u32 %v455, 2147483648
    %v457 = vmul.f32 %v456, 1.442695
    %v458 = vpow.pop %v457
    %v459 = vadd.f32 %v458, 1.0
    %v460 = vrcp.pop %v459
    %v461 = vmul.f32 %v459, %v460
    %v462 = vsub.f32 1.0, %v461
    %v463 = vmul.f32 %v460, %v462
    %v464 = vadd.f32 %v460, %v463
    %vm465 = vweird.f32 %v459
    %vm466 = vweird.f32 %v460
    %vm467 = vmor %vm465, %vm466
    %v468 = vsel %vm467, %v460, %v464
    %v469 = vand.u32 2147483647, %v459
    %vm470 = vcmp.eq.f32.partialorder %v469, 8.507059e+37
    %v471 = vand.u32 %v459, 2147483648
    %v472 = vor.u32 1.1754944e-38, %v471
    %v473 = vsel %vm470, %v472, %v468
    %v474 = vmul.f32 1.0, %v473
    %v475 = vtanh.pop %v455
    %v476 = vmul.f32 %v474, %v421
    %478 = vrot.lane.b32.xlu0 %v475, 64
    %v479 = vpop.permute.xlu0 %478
    %v481 = vmul.f32 %v474, %v479
    %483 = vrot.lane.b32.xlu0 %v481, 32
    %v484 = vpop.permute.xlu0 %483
    %v486 = vadd.f32 %v476, %v484
    %v487 = vtanh.pop %v486
    %489 = vrot.lane.b32.xlu0 %v487, 64
    %v490 = vpop.permute.xlu0 %489
    %v492 = vmul.f32 %v474, %v490
    %s493 = scalar_lea.vmem [#allocation2], 40
    %v494 = vld [vmem:[%s493] sm:$0xff]
    %496 = vrot.lane.b32.xlu0 %v492, 32
    %v497 = vpop.permute.xlu0 %496
    %v498 = vsel %vm167, %v497, 0
    %500 = vmatpush.msra.mxu0 0.0
    %501 = vmatpush.msra.mxu0 0.0
    %502 = vmatpush.msra.mxu0 0.0
    %503 = vmatpush.msra.mxu0 0.0
    %504 = vmatpush.msra.mxu0 0.0
    %505 = vmatpush.msra.mxu0 0.0
    %506 = vmatpush.msra.mxu0 0.0
    %507 = vmatpush.msra.mxu0 0.0
    %508 = vmatpush.msra.mxu0 0.0
    %509 = vmatpush.msra.mxu0 0.0
    %510 = vmatpush.msra.mxu0 0.0
    %511 = vmatpush.msra.mxu0 0.0
    %512 = vmatpush.msra.mxu0 %v163
    %513 = vmatpush.msra.mxu0 %v162
    %514 = vmatpush.msra.mxu0 %v161
    %515 = vmatpush.msra.mxu0 %v160
    %516 = vmatmul.f32.gmra.mxu0 %v498
    %v517 = vpop.f32.mrf.mxu0
    %v518 = vadd.f32 0.0, %v517
    %519 = vdwg.mxu0
    %v520 = vadd.f32 %v494, %v518
    %v521 = vxor.u32 %v520, 2147483648
    %v522 = vmul.f32 %v521, 1.442695
    %v523 = vpow.pop %v522
    %v524 = vadd.f32 %v523, 1.0
    %v525 = vrcp.pop %v524
    %v526 = vmul.f32 %v524, %v525
    %v527 = vsub.f32 1.0, %v526
    %v528 = vmul.f32 %v525, %v527
    %v529 = vadd.f32 %v525, %v528
    %vm530 = vweird.f32 %v524
    %vm531 = vweird.f32 %v525
    %vm532 = vmor %vm530, %vm531
    %v533 = vsel %vm532, %v525, %v529
    %v534 = vand.u32 2147483647, %v524
    %vm535 = vcmp.eq.f32.partialorder %v534, 8.507059e+37
    %v536 = vand.u32 %v524, 2147483648
    %v537 = vor.u32 1.1754944e-38, %v536
    %v538 = vsel %vm535, %v537, %v533
    %v539 = vmul.f32 1.0, %v538
    %v540 = vtanh.pop %v520
    %v541 = vmul.f32 %v539, %v486
    %543 = vrot.lane.b32.xlu0 %v540, 64
    %v544 = vpop.permute.xlu0 %543
    %v546 = vmul.f32 %v539, %v544
    %548 = vrot.lane.b32.xlu0 %v546, 32
    %v549 = vpop.permute.xlu0 %548
    %v551 = vadd.f32 %v541, %v549
    %v552 = vtanh.pop %v551
    %554 = vrot.lane.b32.xlu0 %v552, 64
    %v555 = vpop.permute.xlu0 %554
    %v557 = vmul.f32 %v539, %v555
    %s558 = scalar_lea.vmem [#allocation2], 48
    %v559 = vld [vmem:[%s558] sm:$0xff]
    %561 = vrot.lane.b32.xlu0 %v557, 32
    %v562 = vpop.permute.xlu0 %561
    %v563 = vsel %vm167, %v562, 0
    %565 = vmatpush.msra.mxu0 0.0
    %566 = vmatpush.msra.mxu0 0.0
    %567 = vmatpush.msra.mxu0 0.0
    %568 = vmatpush.msra.mxu0 0.0
    %569 = vmatpush.msra.mxu0 0.0
    %570 = vmatpush.msra.mxu0 0.0
    %571 = vmatpush.msra.mxu0 0.0
    %572 = vmatpush.msra.mxu0 0.0
    %573 = vmatpush.msra.mxu0 0.0
    %574 = vmatpush.msra.mxu0 0.0
    %575 = vmatpush.msra.mxu0 0.0
    %576 = vmatpush.msra.mxu0 0.0
    %577 = vmatpush.msra.mxu0 %v163
    %578 = vmatpush.msra.mxu0 %v162
    %579 = vmatpush.msra.mxu0 %v161
    %580 = vmatpush.msra.mxu0 %v160
    %581 = vmatmul.f32.gmra.mxu0 %v563
    %v582 = vpop.f32.mrf.mxu0
    %v583 = vadd.f32 0.0, %v582
    %584 = vdwg.mxu0
    %v585 = vadd.f32 %v559, %v583
    %v586 = vxor.u32 %v585, 2147483648
    %v587 = vmul.f32 %v586, 1.442695
    %v588 = vpow.pop %v587
    %v589 = vadd.f32 %v588, 1.0
    %v590 = vrcp.pop %v589
    %v591 = vmul.f32 %v589, %v590
    %v592 = vsub.f32 1.0, %v591
    %v593 = vmul.f32 %v590, %v592
    %v594 = vadd.f32 %v590, %v593
    %vm595 = vweird.f32 %v589
    %vm596 = vweird.f32 %v590
    %vm597 = vmor %vm595, %vm596
    %v598 = vsel %vm597, %v590, %v594
    %v599 = vand.u32 2147483647, %v589
    %vm600 = vcmp.eq.f32.partialorder %v599, 8.507059e+37
    %v601 = vand.u32 %v589, 2147483648
    %v602 = vor.u32 1.1754944e-38, %v601
    %v603 = vsel %vm600, %v602, %v598
    %v604 = vmul.f32 1.0, %v603
    %v605 = vtanh.pop %v585
    %v606 = vmul.f32 %v604, %v551
    %608 = vrot.lane.b32.xlu0 %v605, 64
    %v609 = vpop.permute.xlu0 %608
    %v611 = vmul.f32 %v604, %v609
    %613 = vrot.lane.b32.xlu0 %v611, 32
    %v614 = vpop.permute.xlu0 %613
    %v616 = vadd.f32 %v606, %v614
    %v617 = vtanh.pop %v616
    %619 = vrot.lane.b32.xlu0 %v617, 64
    %v620 = vpop.permute.xlu0 %619
    %v622 = vmul.f32 %v604, %v620
    %s623 = scalar_lea.vmem [#allocation2], 56
    %v624 = vld [vmem:[%s623] sm:$0xff]
    %626 = vrot.lane.b32.xlu0 %v622, 32
    %v627 = vpop.permute.xlu0 %626
    %v628 = vsel %vm167, %v627, 0
    %630 = vmatpush.msra.mxu0 0.0
    %631 = vmatpush.msra.mxu0 0.0
    %632 = vmatpush.msra.mxu0 0.0
    %633 = vmatpush.msra.mxu0 0.0
    %634 = vmatpush.msra.mxu0 0.0
    %635 = vmatpush.msra.mxu0 0.0
    %636 = vmatpush.msra.mxu0 0.0
    %637 = vmatpush.msra.mxu0 0.0
    %638 = vmatpush.msra.mxu0 0.0
    %639 = vmatpush.msra.mxu0 0.0
    %640 = vmatpush.msra.mxu0 0.0
    %641 = vmatpush.msra.mxu0 0.0
    %642 = vmatpush.msra.mxu0 %v163
    %643 = vmatpush.msra.mxu0 %v162
    %644 = vmatpush.msra.mxu0 %v161
    %645 = vmatpush.msra.mxu0 %v160
    %646 = vmatmul.f32.gmra.mxu0 %v628
    %v647 = vpop.f32.mrf.mxu0
    %v648 = vadd.f32 0.0, %v647
    %649 = vdwg.mxu0
    %v650 = vadd.f32 %v624, %v648
    %v651 = vxor.u32 %v650, 2147483648
    %v652 = vmul.f32 %v651, 1.442695
    %v653 = vpow.pop %v652
    %v654 = vadd.f32 %v653, 1.0
    %v655 = vrcp.pop %v654
    %v656 = vmul.f32 %v654, %v655
    %v657 = vsub.f32 1.0, %v656
    %v658 = vmul.f32 %v655, %v657
    %v659 = vadd.f32 %v655, %v658
    %vm660 = vweird.f32 %v654
    %vm661 = vweird.f32 %v655
    %vm662 = vmor %vm660, %vm661
    %v663 = vsel %vm662, %v655, %v659
    %v664 = vand.u32 2147483647, %v654
    %vm665 = vcmp.eq.f32.partialorder %v664, 8.507059e+37
    %v666 = vand.u32 %v654, 2147483648
    %v667 = vor.u32 1.1754944e-38, %v666
    %v668 = vsel %vm665, %v667, %v663
    %v669 = vmul.f32 1.0, %v668
    %v670 = vtanh.pop %v650
    %v671 = vmul.f32 %v669, %v616
    %673 = vrot.lane.b32.xlu0 %v670, 64
    %v674 = vpop.permute.xlu0 %673
    %v676 = vmul.f32 %v669, %v674
    %678 = vrot.lane.b32.xlu0 %v676, 32
    %v679 = vpop.permute.xlu0 %678
    %v681 = vadd.f32 %v671, %v679
    %v682 = vtanh.pop %v681
    %684 = vrot.lane.b32.xlu0 %v682, 64
    %v685 = vpop.permute.xlu0 %684
    %v687 = vmul.f32 %v669, %v685
    %689 = vrot.lane.b32.xlu0 %v687, 32
    %v690 = vpop.permute.xlu0 %689
    %692 = vst.msk [vmem:[#allocation3] sm:$0xff] %vm167, %v690
    %694 = vrot.lane.b32.xlu0 %v681, 96
    %v695 = vpop.permute.xlu0 %694
    %697 = vst.msk [vmem:[#allocation4] sm:$0xff] %vm167, %v695
    // Predicated region
    $region38: #{tpu_custom_call.1} parent=1 // pred_check
      %p698 = pneg %p57
    $region39: #{tpu_custom_call.1} parent=1 // pred_check_branch
      %700 = sbr.rel (%p698) target = $region41
    $region40: #{tpu_custom_call.1} parent=1 // pred_region
      %v701 = vld [vmem:[%s4] sm:$0xff]
      %v702 = vld [vmem:[%s4 + $0x8] sm:$0xff]
      %v703 = vld [vmem:[%s4 + $0x10] sm:$0xff]
      %v704 = vld [vmem:[%s4 + $0x18] sm:$0xff]
      %v705 = vld [vmem:[#allocation5] sm:$0x1]
      %v707 = vperm.slane %v705, 0
      %v709 = vsel %vm167, %v690, 0
      %711 = vmatpush.msra.mxu0 0.0
      %712 = vmatpush.msra.mxu0 0.0
      %713 = vmatpush.msra.mxu0 0.0
      %714 = vmatpush.msra.mxu0 0.0
      %715 = vmatpush.msra.mxu0 0.0
      %716 = vmatpush.msra.mxu0 0.0
      %717 = vmatpush.msra.mxu0 0.0
      %718 = vmatpush.msra.mxu0 0.0
      %719 = vmatpush.msra.mxu0 0.0
      %720 = vmatpush.msra.mxu0 0.0
      %721 = vmatpush.msra.mxu0 0.0
      %722 = vmatpush.msra.mxu0 0.0
      %723 = vmatpush.msra.mxu0 %v704
      %724 = vmatpush.msra.mxu0 %v703
      %725 = vmatpush.msra.mxu0 %v702
      %726 = vmatpush.msra.mxu0 %v701
      %727 = vmatmul.f32.gmra.mxu0 %v709
      %v728 = vpop.f32.mrf.mxu0
      %v729 = vadd.f32 %v707, %v728
      %730 = vdwg.mxu0
      %vm731 = vcmask 7168
      %732 = vst.msk [vmem:[%s6] sm:$0xff] %vm731, %v729
    $region41: #{tpu_custom_call.1} parent=1 // pred_fallthru
      _
    // Predicated region
    $region42: #{tpu_custom_call.1} parent=1 // pred_check
      _
    $region43: #{tpu_custom_call.1} parent=1 // pred_check_branch
      %734 = sbr.rel (0) target = $region45
    $region44: #{tpu_custom_call.1} parent=1 // pred_region
      _
    $region45: #{tpu_custom_call.1} parent=1 // pred_fallthru
      _
    // Predicated region
    $region46: #{tpu_custom_call.1} parent=1 // pred_check
      _
    $region47: #{tpu_custom_call.1} parent=1 // pred_check_branch
      %736 = sbr.rel (0) target = $region49
    $region48: #{tpu_custom_call.1} parent=1 // pred_region
      _
    $region49: #{tpu_custom_call.1} parent=1 // pred_fallthru
      _
    %737 = vsyncpa [#allocation7], 1
    %738 = vsyncpa [#allocation9], 1

// kernel: tpu_custom_call.1
$region0: #{tpu_custom_call.1}
  #allocation0 [shape = 'u32[]', space=smem, size = 0x4, offset = 0x4, fixed_abs, tag = 'smem constant byte address 0x4 - core index']
  #allocation1 [shape = 'u32[72,128]{1,0:T(1,128)}', space=vmem, size = 0x9000, scoped, tag = 'internal scratch']
  #allocation2 [shape = 'f32[8,8,128]{2,1,0:T(8,128)}', space=vmem, size = 0x8000, scoped, tag = 'scratch operand']
  #allocation3 [shape = 'f32[8,32]{1,0:T(8,128)}', space=vmem, size = 0x1000, scoped, tag = 'scratch operand']
  #allocation4 [shape = 'f32[8,32]{1,0:T(8,128)}', space=vmem, size = 0x1000, scoped, tag = 'scratch operand']
  #allocation5 [shape = 'f32[1,1]{1,0:T(1,128)S(1)}', space=vmem, size = 0x200, scoped, tag = 'scoped memory for tpu_custom_call.1']
  %s0 = inlined_call_operand.hbm [shape: f32[8,8,16], index: 0, kind: input, shape index: {}]
  %s1 = inlined_call_operand.hbm [shape: f32[16,128], index: 1, kind: input, shape index: {}]
  %s2 = inlined_call_operand.vmem [shape: f32[32,128], index: 2, kind: input, shape index: {}]
  %s3 = inlined_call_operand.vmem [shape: f32[1,128], index: 3, kind: input, shape index: {}]
  %s4 = inlined_call_operand.vmem [shape: f32[32,1], index: 4, kind: input, shape index: {}]
  %s5 = inlined_call_operand.<no memory space> [shape: f32[1,1], index: 5, kind: input, shape index: {}]
  %s6 = inlined_call_operand.vmem [shape: f32[8,1], index: 6, kind: output, shape index: {}]
  %s7 = sld [smem:[#allocation0]]
  $region50: #{tpu_custom_call.1} parent=0
    _
  %s9 = ssub.s32 1, %s7
  %s10 = scalar_select 0, %s9, %s7
  %v11 = vstv %s5
  %12 = vst [vmem:[#allocation5] sm:$0x1] %v11
  $region1: #{tpu_custom_call.1} parent=0
    #allocation6 [shape = 'u8[32768]{0}', space=vmem, size = 0x8000, scoped, tag = 'input window, operand 0, single buffered']
    #allocation7 [shape = 's32[1]{0}', space=sflag, size = 0x4, scoped, tag = 'scoped memory for tpu_custom_call.1']
    #allocation8 [shape = 'u8[8192]{0}', space=vmem, size = 0x2000, scoped, tag = 'input window, operand 1, single buffered']
    #allocation9 [shape = 's32[1]{0}', space=sflag, size = 0x4, scoped, tag = 'scoped memory for tpu_custom_call.1']
    %13 = vsyncpa [#allocation7], 0
    %14 = vsyncpa [#allocation9], 0
    // Predicated region
    $region2: #{tpu_custom_call.1} parent=1 // pred_check
      _
    $region3: #{tpu_custom_call.1} parent=1 // pred_check_branch
      %16 = sbr.rel (0) target = $region5
    $region4: #{tpu_custom_call.1} parent=1 // pred_region
      %18 = vsyncadd [#allocation7], 0
      %s19 = sshll.u32 %s0, 4
      %s20 = int_to_ptr.hbm [resolvable:$true] %s19
      %s21 = sshll.u32 [#allocation6], 4
      %s22 = int_to_ptr.vmem [resolvable:$true] %s21
      %27 = dma.hbm_to_vmem [thread:$0]  %s20, 1024, %s22, [#allocation7], 128, 128, 8
    $region5: #{tpu_custom_call.1} parent=1 // pred_fallthru
      _
    // Predicated region
    $region6: #{tpu_custom_call.1} parent=1 // pred_check
      _
    $region7: #{tpu_custom_call.1} parent=1 // pred_check_branch
      %29 = sbr.rel (0) target = $region9
    $region8: #{tpu_custom_call.1} parent=1 // pred_region
      %31 = vsyncadd [#allocation9], 0
      %s32 = sshll.u32 %s1, 4
      %s33 = int_to_ptr.hbm [resolvable:$true] %s32
      %s34 = sshll.u32 [#allocation8], 4
      %s35 = int_to_ptr.vmem [resolvable:$true] %s34
      %40 = dma.hbm_to_vmem [thread:$0]  %s33, 256, %s35, [#allocation9], 128, 128, 8
    $region9: #{tpu_custom_call.1} parent=1 // pred_fallthru
      _
    // Predicated region
    $region10: #{tpu_custom_call.1} parent=1 // pred_check
      _
    $region11: #{tpu_custom_call.1} parent=1 // pred_check_branch
      %42 = sbr.rel (0) target = $region13
    $region12: #{tpu_custom_call.1} parent=1 // pred_region
      _
    $region13: #{tpu_custom_call.1} parent=1 // pred_fallthru
      _
    // Predicated region
    $region14: #{tpu_custom_call.1} parent=1 // pred_check
      _
    $region15: #{tpu_custom_call.1} parent=1 // pred_check_branch
      %44 = sbr.rel (0) target = $region17
    $region16: #{tpu_custom_call.1} parent=1 // pred_region
      _
    $region17: #{tpu_custom_call.1} parent=1 // pred_fallthru
      _
    // Predicated region
    $region18: #{tpu_custom_call.1} parent=1 // pred_check
      _
    $region19: #{tpu_custom_call.1} parent=1 // pred_check_branch
      %46 = sbr.rel (0) target = $region21
    $region20: #{tpu_custom_call.1} parent=1 // pred_region
      _
    $region21: #{tpu_custom_call.1} parent=1 // pred_fallthru
      _
    // Predicated region
    $region22: #{tpu_custom_call.1} parent=1 // pred_check
      _
    $region23: #{tpu_custom_call.1} parent=1 // pred_check_branch
      %48 = sbr.rel (0) target = $region25
    $region24: #{tpu_custom_call.1} parent=1 // pred_region
      _
    $region25: #{tpu_custom_call.1} parent=1 // pred_fallthru
      _
    // Predicated region
    $region26: #{tpu_custom_call.1} parent=1 // pred_check
      _
    $region27: #{tpu_custom_call.1} parent=1 // pred_check_branch
      %50 = sbr.rel (0) target = $region29
    $region28: #{tpu_custom_call.1} parent=1 // pred_region
      %52 = dma.done [#allocation7], 1024
    $region29: #{tpu_custom_call.1} parent=1 // pred_fallthru
      _
    // Predicated region
    $region30: #{tpu_custom_call.1} parent=1 // pred_check
      _
    $region31: #{tpu_custom_call.1} parent=1 // pred_check_branch
      %54 = sbr.rel (0) target = $region33
    $region32: #{tpu_custom_call.1} parent=1 // pred_region
      %56 = dma.done [#allocation9], 256
    $region33: #{tpu_custom_call.1} parent=1 // pred_fallthru
      _
    %p57 = scmp.eq.s32.totalorder 0, 0
    // Predicated region
    $region34: #{tpu_custom_call.1} parent=1 // pred_check
      %p58 = pneg %p57
    $region35: #{tpu_custom_call.1} parent=1 // pred_check_branch
      %60 = sbr.rel (%p58) target = $region37
    $region36: #{tpu_custom_call.1} parent=1 // pred_region
      %vm61 = vcmask 261120
      %62 = vst.msk [vmem:[#allocation3] sm:$0xff] %vm61, 0.0
      %63 = vst.msk [vmem:[#allocation4] sm:$0xff] %vm61, 0.0
    $region37: #{tpu_custom_call.1} parent=1 // pred_fallthru
      _
    %v64 = vld [vmem:[#allocation6] sm:$0xff]
    %v65 = vld [vmem:[#allocation6 + $0x8] sm:$0xff]
    %v66 = vld [vmem:[#allocation6 + $0x10] sm:$0xff]
    %v67 = vld [vmem:[#allocation6 + $0x18] sm:$0xff]
    %v68 = vld [vmem:[#allocation6 + $0x20] sm:$0xff]
    %v69 = vld [vmem:[#allocation6 + $0x28] sm:$0xff]
    %v70 = vld [vmem:[#allocation6 + $0x30] sm:$0xff]
    %v71 = vld [vmem:[#allocation6 + $0x38] sm:$0xff]
    %v72 = vld [vmem:[#allocation8] sm:$0xff]
    %v73 = vld [vmem:[#allocation8 + $0x8] sm:$0xff]
    %vm74 = vcmask 130048
    %v76 = vsel %vm74, %v64, 0
    %v79 = vsel %vm74, %v65, 0
    %v82 = vsel %vm74, %v66, 0
    %v85 = vsel %vm74, %v67, 0
    %v88 = vsel %vm74, %v68, 0
    %v91 = vsel %vm74, %v69, 0
    %v94 = vsel %vm74, %v70, 0
    %v97 = vsel %vm74, %v71, 0
    %99 = vmatpush.msra.mxu0 0.0
    %100 = vmatpush.msra.mxu0 0.0
    %101 = vmatpush.msra.mxu0 0.0
    %102 = vmatpush.msra.mxu0 0.0
    %103 = vmatpush.msra.mxu0 0.0
    %104 = vmatpush.msra.mxu0 0.0
    %105 = vmatpush.msra.mxu0 0.0
    %106 = vmatpush.msra.mxu0 0.0
    %107 = vmatpush.msra.mxu0 0.0
    %108 = vmatpush.msra.mxu0 0.0
    %109 = vmatpush.msra.mxu0 0.0
    %110 = vmatpush.msra.mxu0 0.0
    %111 = vmatpush.msra.mxu0 0.0
    %112 = vmatpush.msra.mxu0 0.0
    %113 = vmatpush.msra.mxu0 %v73
    %114 = vmatpush.msra.mxu0 %v72
    %115 = vmatmul.f32.gmra.mxu0 %v76
    %v116 = vpop.f32.mrf.mxu0
    %v117 = vadd.f32 0.0, %v116
    %118 = vmatmul.f32.gmra.mxu0 %v79
    %v119 = vpop.f32.mrf.mxu0
    %v120 = vadd.f32 0.0, %v119
    %121 = vmatmul.f32.gmra.mxu0 %v82
    %v122 = vpop.f32.mrf.mxu0
    %v123 = vadd.f32 0.0, %v122
    %124 = vmatmul.f32.gmra.mxu0 %v85
    %v125 = vpop.f32.mrf.mxu0
    %v126 = vadd.f32 0.0, %v125
    %127 = vmatmul.f32.gmra.mxu0 %v88
    %v128 = vpop.f32.mrf.mxu0
    %v129 = vadd.f32 0.0, %v128
    %130 = vmatmul.f32.gmra.mxu0 %v91
    %v131 = vpop.f32.mrf.mxu0
    %v132 = vadd.f32 0.0, %v131
    %133 = vmatmul.f32.gmra.mxu0 %v94
    %v134 = vpop.f32.mrf.mxu0
    %v135 = vadd.f32 0.0, %v134
    %136 = vmatmul.f32.gmra.mxu0 %v97
    %v137 = vpop.f32.mrf.mxu0
    %v138 = vadd.f32 0.0, %v137
    %139 = vdwg.mxu0
    %v140 = vld [vmem:[%s3] sm:$0x1]
    %v142 = vperm.slane %v140, 0
    %v144 = vadd.f32 %v117, %v142
    %v145 = vadd.f32 %v120, %v142
    %v146 = vadd.f32 %v123, %v142
    %v147 = vadd.f32 %v126, %v142
    %v148 = vadd.f32 %v129, %v142
    %v149 = vadd.f32 %v132, %v142
    %v150 = vadd.f32 %v135, %v142
    %v151 = vadd.f32 %v138, %v142
    %152 = vst [vmem:[#allocation2] sm:$0xff] %v144
    %153 = vst [vmem:[#allocation2 + $0x8] sm:$0xff] %v145
    %154 = vst [vmem:[#allocation2 + $0x10] sm:$0xff] %v146
    %155 = vst [vmem:[#allocation2 + $0x18] sm:$0xff] %v147
    %156 = vst [vmem:[#allocation2 + $0x20] sm:$0xff] %v148
    %157 = vst [vmem:[#allocation2 + $0x28] sm:$0xff] %v149
    %158 = vst [vmem:[#allocation2 + $0x30] sm:$0xff] %v150
    %159 = vst [vmem:[#allocation2 + $0x38] sm:$0xff] %v151
    %v160 = vld [vmem:[%s2] sm:$0xff]
    %v161 = vld [vmem:[%s2 + $0x8] sm:$0xff]
    %v162 = vld [vmem:[%s2 + $0x10] sm:$0xff]
    %v163 = vld [vmem:[%s2 + $0x18] sm:$0xff]
    %v164 = vld [vmem:[#allocation3] sm:$0xff]
    %v165 = vld [vmem:[#allocation4] sm:$0xff]
    %v166 = vld [vmem:[#allocation2] sm:$0xff]
    %vm167 = vcmask 261120
    %v169 = vsel %vm167, %v164, 0
    %171 = vmatpush.msra.mxu0 0.0
    %172 = vmatpush.msra.mxu0 0.0
    %173 = vmatpush.msra.mxu0 0.0
    %174 = vmatpush.msra.mxu0 0.0
    %175 = vmatpush.msra.mxu0 0.0
    %176 = vmatpush.msra.mxu0 0.0
    %177 = vmatpush.msra.mxu0 0.0
    %178 = vmatpush.msra.mxu0 0.0
    %179 = vmatpush.msra.mxu0 0.0
    %180 = vmatpush.msra.mxu0 0.0
    %181 = vmatpush.msra.mxu0 0.0
    %182 = vmatpush.msra.mxu0 0.0
    %183 = vmatpush.msra.mxu0 %v163
    %184 = vmatpush.msra.mxu0 %v162
    %185 = vmatpush.msra.mxu0 %v161
    %186 = vmatpush.msra.mxu0 %v160
    %187 = vmatmul.f32.gmra.mxu0 %v169
    %v188 = vpop.f32.mrf.mxu0
    %v189 = vadd.f32 0.0, %v188
    %190 = vdwg.mxu0
    %v191 = vadd.f32 %v166, %v189
    %v192 = vxor.u32 %v191, 2147483648
    %v193 = vmul.f32 %v192, 1.442695
    %v194 = vpow.pop %v193
    %v195 = vadd.f32 %v194, 1.0
    %v196 = vrcp.pop %v195
    %v197 = vmul.f32 %v195, %v196
    %v198 = vsub.f32 1.0, %v197
    %v199 = vmul.f32 %v196, %v198
    %v200 = vadd.f32 %v196, %v199
    %vm201 = vweird.f32 %v195
    %vm202 = vweird.f32 %v196
    %vm203 = vmor %vm201, %vm202
    %v204 = vsel %vm203, %v196, %v200
    %v205 = vand.u32 2147483647, %v195
    %vm206 = vcmp.eq.f32.partialorder %v205, 8.507059e+37
    %v207 = vand.u32 %v195, 2147483648
    %v208 = vor.u32 1.1754944e-38, %v207
    %v209 = vsel %vm206, %v208, %v204
    %v210 = vmul.f32 1.0, %v209
    %v211 = vtanh.pop %v191
    %213 = vrot.lane.b32.xlu0 %v165, 32
    %v214 = vpop.permute.xlu0 %213
    %v216 = vmul.f32 %v210, %v214
    %218 = vrot.lane.b32.xlu0 %v211, 64
    %v219 = vpop.permute.xlu0 %218
    %v221 = vmul.f32 %v210, %v219
    %223 = vrot.lane.b32.xlu0 %v221, 32
    %v224 = vpop.permute.xlu0 %223
    %v226 = vadd.f32 %v216, %v224
    %v227 = vtanh.pop %v226
    %229 = vrot.lane.b32.xlu0 %v227, 64
    %v230 = vpop.permute.xlu0 %229
    %v232 = vmul.f32 %v210, %v230
    %s233 = scalar_lea.vmem [#allocation2], 8
    %v234 = vld [vmem:[%s233] sm:$0xff]
    %236 = vrot.lane.b32.xlu0 %v232, 32
    %v237 = vpop.permute.xlu0 %236
    %v238 = vsel %vm167, %v237, 0
    %240 = vmatpush.msra.mxu0 0.0
    %241 = vmatpush.msra.mxu0 0.0
    %242 = vmatpush.msra.mxu0 0.0
    %243 = vmatpush.msra.mxu0 0.0
    %244 = vmatpush.msra.mxu0 0.0
    %245 = vmatpush.msra.mxu0 0.0
    %246 = vmatpush.msra.mxu0 0.0
    %247 = vmatpush.msra.mxu0 0.0
    %248 = vmatpush.msra.mxu0 0.0
    %249 = vmatpush.msra.mxu0 0.0
    %250 = vmatpush.msra.mxu0 0.0
    %251 = vmatpush.msra.mxu0 0.0
    %252 = vmatpush.msra.mxu0 %v163
    %253 = vmatpush.msra.mxu0 %v162
    %254 = vmatpush.msra.mxu0 %v161
    %255 = vmatpush.msra.mxu0 %v160
    %256 = vmatmul.f32.gmra.mxu0 %v238
    %v257 = vpop.f32.mrf.mxu0
    %v258 = vadd.f32 0.0, %v257
    %259 = vdwg.mxu0
    %v260 = vadd.f32 %v234, %v258
    %v261 = vxor.u32 %v260, 2147483648
    %v262 = vmul.f32 %v261, 1.442695
    %v263 = vpow.pop %v262
    %v264 = vadd.f32 %v263, 1.0
    %v265 = vrcp.pop %v264
    %v266 = vmul.f32 %v264, %v265
    %v267 = vsub.f32 1.0, %v266
    %v268 = vmul.f32 %v265, %v267
    %v269 = vadd.f32 %v265, %v268
    %vm270 = vweird.f32 %v264
    %vm271 = vweird.f32 %v265
    %vm272 = vmor %vm270, %vm271
    %v273 = vsel %vm272, %v265, %v269
    %v274 = vand.u32 2147483647, %v264
    %vm275 = vcmp.eq.f32.partialorder %v274, 8.507059e+37
    %v276 = vand.u32 %v264, 2147483648
    %v277 = vor.u32 1.1754944e-38, %v276
    %v278 = vsel %vm275, %v277, %v273
    %v279 = vmul.f32 1.0, %v278
    %v280 = vtanh.pop %v260
    %v281 = vmul.f32 %v279, %v226
    %283 = vrot.lane.b32.xlu0 %v280, 64
    %v284 = vpop.permute.xlu0 %283
    %v286 = vmul.f32 %v279, %v284
    %288 = vrot.lane.b32.xlu0 %v286, 32
    %v289 = vpop.permute.xlu0 %288
    %v291 = vadd.f32 %v281, %v289
    %v292 = vtanh.pop %v291
    %294 = vrot.lane.b32.xlu0 %v292, 64
    %v295 = vpop.permute.xlu0 %294
    %v297 = vmul.f32 %v279, %v295
    %s298 = scalar_lea.vmem [#allocation2], 16
    %v299 = vld [vmem:[%s298] sm:$0xff]
    %301 = vrot.lane.b32.xlu0 %v297, 32
    %v302 = vpop.permute.xlu0 %301
    %v303 = vsel %vm167, %v302, 0
    %305 = vmatpush.msra.mxu0 0.0
    %306 = vmatpush.msra.mxu0 0.0
    %307 = vmatpush.msra.mxu0 0.0
    %308 = vmatpush.msra.mxu0 0.0
    %309 = vmatpush.msra.mxu0 0.0
    %310 = vmatpush.msra.mxu0 0.0
    %311 = vmatpush.msra.mxu0 0.0
    %312 = vmatpush.msra.mxu0 0.0
    %313 = vmatpush.msra.mxu0 0.0
    %314 = vmatpush.msra.mxu0 0.0
    %315 = vmatpush.msra.mxu0 0.0
    %316 = vmatpush.msra.mxu0 0.0
    %317 = vmatpush.msra.mxu0 %v163
    %318 = vmatpush.msra.mxu0 %v162
    %319 = vmatpush.msra.mxu0 %v161
    %320 = vmatpush.msra.mxu0 %v160
    %321 = vmatmul.f32.gmra.mxu0 %v303
    %v322 = vpop.f32.mrf.mxu0
    %v323 = vadd.f32 0.0, %v322
    %324 = vdwg.mxu0
    %v325 = vadd.f32 %v299, %v323
    %v326 = vxor.u32 %v325, 2147483648
    %v327 = vmul.f32 %v326, 1.442695
    %v328 = vpow.pop %v327
    %v329 = vadd.f32 %v328, 1.0
    %v330 = vrcp.pop %v329
    %v331 = vmul.f32 %v329, %v330
    %v332 = vsub.f32 1.0, %v331
    %v333 = vmul.f32 %v330, %v332
    %v334 = vadd.f32 %v330, %v333
    %vm335 = vweird.f32 %v329
    %vm336 = vweird.f32 %v330
    %vm337 = vmor %vm335, %vm336
    %v338 = vsel %vm337, %v330, %v334
    %v339 = vand.u32 2147483647, %v329
    %vm340 = vcmp.eq.f32.partialorder %v339, 8.507059e+37
    %v341 = vand.u32 %v329, 2147483648
    %v342 = vor.u32 1.1754944e-38, %v341
    %v343 = vsel %vm340, %v342, %v338
    %v344 = vmul.f32 1.0, %v343
    %v345 = vtanh.pop %v325
    %v346 = vmul.f32 %v344, %v291
    %348 = vrot.lane.b32.xlu0 %v345, 64
    %v349 = vpop.permute.xlu0 %348
    %v351 = vmul.f32 %v344, %v349
    %353 = vrot.lane.b32.xlu0 %v351, 32
    %v354 = vpop.permute.xlu0 %353
    %v356 = vadd.f32 %v346, %v354
    %v357 = vtanh.pop %v356
    %359 = vrot.lane.b32.xlu0 %v357, 64
    %v360 = vpop.permute.xlu0 %359
    %v362 = vmul.f32 %v344, %v360
    %s363 = scalar_lea.vmem [#allocation2], 24
    %v364 = vld [vmem:[%s363] sm:$0xff]
    %366 = vrot.lane.b32.xlu0 %v362, 32
    %v367 = vpop.permute.xlu0 %366
    %v368 = vsel %vm167, %v367, 0
    %370 = vmatpush.msra.mxu0 0.0
    %371 = vmatpush.msra.mxu0 0.0
    %372 = vmatpush.msra.mxu0 0.0
    %373 = vmatpush.msra.mxu0 0.0
    %374 = vmatpush.msra.mxu0 0.0
    %375 = vmatpush.msra.mxu0 0.0
    %376 = vmatpush.msra.mxu0 0.0
    %377 = vmatpush.msra.mxu0 0.0
    %378 = vmatpush.msra.mxu0 0.0
    %379 = vmatpush.msra.mxu0 0.0
    %380 = vmatpush.msra.mxu0 0.0
    %381 = vmatpush.msra.mxu0 0.0
    %382 = vmatpush.msra.mxu0 %v163
    %383 = vmatpush.msra.mxu0 %v162
    %384 = vmatpush.msra.mxu0 %v161
    %385 = vmatpush.msra.mxu0 %v160
    %386 = vmatmul.f32.gmra.mxu0 %v368
    %v387 = vpop.f32.mrf.mxu0
    %v388 = vadd.f32 0.0, %v387
    %389 = vdwg.mxu0
    %v390 = vadd.f32 %v364, %v388
    %v391 = vxor.u32 %v390, 2147483648
    %v392 = vmul.f32 %v391, 1.442695
    %v393 = vpow.pop %v392
    %v394 = vadd.f32 %v393, 1.0
    %v395 = vrcp.pop %v394
    %v396 = vmul.f32 %v394, %v395
    %v397 = vsub.f32 1.0, %v396
    %v398 = vmul.f32 %v395, %v397
    %v399 = vadd.f32 %v395, %v398
    %vm400 = vweird.f32 %v394
    %vm401 = vweird.f32 %v395
    %vm402 = vmor %vm400, %vm401
    %v403 = vsel %vm402, %v395, %v399
    %v404 = vand.u32 2147483647, %v394
    %vm405 = vcmp.eq.f32.partialorder %v404, 8.507059e+37
    %v406 = vand.u32 %v394, 2147483648
    %v407 = vor.u32 1.1754944e-38, %v406
    %v408 = vsel %vm405, %v407, %v403
    %v409 = vmul.f32 1.0, %v408
    %v410 = vtanh.pop %v390
    %v411 = vmul.f32 %v409, %v356
    %413 = vrot.lane.b32.xlu0 %v410, 64
    %v414 = vpop.permute.xlu0 %413
    %v416 = vmul.f32 %v409, %v414
    %418 = vrot.lane.b32.xlu0 %v416, 32
    %v419 = vpop.permute.xlu0 %418
    %v421 = vadd.f32 %v411, %v419
    %v422 = vtanh.pop %v421
    %424 = vrot.lane.b32.xlu0 %v422, 64
    %v425 = vpop.permute.xlu0 %424
    %v427 = vmul.f32 %v409, %v425
    %s428 = scalar_lea.vmem [#allocation2], 32
    %v429 = vld [vmem:[%s428] sm:$0xff]
    %431 = vrot.lane.b32.xlu0 %v427, 32
    %v432 = vpop.permute.xlu0 %431
    %v433 = vsel %vm167, %v432, 0
    %435 = vmatpush.msra.mxu0 0.0
    %436 = vmatpush.msra.mxu0 0.0
    %437 = vmatpush.msra.mxu0 0.0
    %438 = vmatpush.msra.mxu0 0.0
    %439 = vmatpush.msra.mxu0 0.0
    %440 = vmatpush.msra.mxu0 0.0
    %441 = vmatpush.msra.mxu0 0.0
    %442 = vmatpush.msra.mxu0 0.0
    %443 = vmatpush.msra.mxu0 0.0
    %444 = vmatpush.msra.mxu0 0.0
    %445 = vmatpush.msra.mxu0 0.0
    %446 = vmatpush.msra.mxu0 0.0
    %447 = vmatpush.msra.mxu0 %v163
    %448 = vmatpush.msra.mxu0 %v162
    %449 = vmatpush.msra.mxu0 %v161
    %450 = vmatpush.msra.mxu0 %v160
    %451 = vmatmul.f32.gmra.mxu0 %v433
    %v452 = vpop.f32.mrf.mxu0
    %v453 = vadd.f32 0.0, %v452
    %454 = vdwg.mxu0
    %v455 = vadd.f32 %v429, %v453
    %v456 = vxor.u32 %v455, 2147483648
    %v457 = vmul.f32 %v456, 1.442695
    %v458 = vpow.pop %v457
    %v459 = vadd.f32 %v458, 1.0
    %v460 = vrcp.pop %v459
    %v461 = vmul.f32 %v459, %v460
    %v462 = vsub.f32 1.0, %v461
    %v463 = vmul.f32 %v460, %v462
    %v464 = vadd.f32 %v460, %v463
    %vm465 = vweird.f32 %v459
    %vm466 = vweird.f32 %v460
    %vm467 = vmor %vm465, %vm466
    %v468 = vsel %vm467, %v460, %v464
    %v469 = vand.u32 2147483647, %v459
    %vm470 = vcmp.eq.f32.partialorder %v469, 8.507059e+37
    %v471 = vand.u32 %v459, 2147483648
    %v472 = vor.u32 1.1754944e-38, %v471
    %v473 = vsel %vm470, %v472, %v468
    %v474 = vmul.f32 1.0, %v473
    %v475 = vtanh.pop %v455
    %v476 = vmul.f32 %v474, %v421
    %478 = vrot.lane.b32.xlu0 %v475, 64
    %v479 = vpop.permute.xlu0 %478
    %v481 = vmul.f32 %v474, %v479
    %483 = vrot.lane.b32.xlu0 %v481, 32
    %v484 = vpop.permute.xlu0 %483
    %v486 = vadd.f32 %v476, %v484
    %v487 = vtanh.pop %v486
    %489 = vrot.lane.b32.xlu0 %v487, 64
    %v490 = vpop.permute.xlu0 %489
    %v492 = vmul.f32 %v474, %v490
    %s493 = scalar_lea.vmem [#allocation2], 40
    %v494 = vld [vmem:[%s493] sm:$0xff]
    %496 = vrot.lane.b32.xlu0 %v492, 32
    %v497 = vpop.permute.xlu0 %496
    %v498 = vsel %vm167, %v497, 0
    %500 = vmatpush.msra.mxu0 0.0
    %501 = vmatpush.msra.mxu0 0.0
    %502 = vmatpush.msra.mxu0 0.0
    %503 = vmatpush.msra.mxu0 0.0
    %504 = vmatpush.msra.mxu0 0.0
    %505 = vmatpush.msra.mxu0 0.0
    %506 = vmatpush.msra.mxu0 0.0
    %507 = vmatpush.msra.mxu0 0.0
    %508 = vmatpush.msra.mxu0 0.0
    %509 = vmatpush.msra.mxu0 0.0
    %510 = vmatpush.msra.mxu0 0.0
    %511 = vmatpush.msra.mxu0 0.0
    %512 = vmatpush.msra.mxu0 %v163
    %513 = vmatpush.msra.mxu0 %v162
    %514 = vmatpush.msra.mxu0 %v161
    %515 = vmatpush.msra.mxu0 %v160
    %516 = vmatmul.f32.gmra.mxu0 %v498
    %v517 = vpop.f32.mrf.mxu0
    %v518 = vadd.f32 0.0, %v517
    %519 = vdwg.mxu0
    %v520 = vadd.f32 %v494, %v518
    %v521 = vxor.u32 %v520, 2147483648
    %v522 = vmul.f32 %v521, 1.442695
    %v523 = vpow.pop %v522
    %v524 = vadd.f32 %v523, 1.0
    %v525 = vrcp.pop %v524
    %v526 = vmul.f32 %v524, %v525
    %v527 = vsub.f32 1.0, %v526
    %v528 = vmul.f32 %v525, %v527
    %v529 = vadd.f32 %v525, %v528
    %vm530 = vweird.f32 %v524
    %vm531 = vweird.f32 %v525
    %vm532 = vmor %vm530, %vm531
    %v533 = vsel %vm532, %v525, %v529
    %v534 = vand.u32 2147483647, %v524
    %vm535 = vcmp.eq.f32.partialorder %v534, 8.507059e+37
    %v536 = vand.u32 %v524, 2147483648
    %v537 = vor.u32 1.1754944e-38, %v536
    %v538 = vsel %vm535, %v537, %v533
    %v539 = vmul.f32 1.0, %v538
    %v540 = vtanh.pop %v520
    %v541 = vmul.f32 %v539, %v486
    %543 = vrot.lane.b32.xlu0 %v540, 64
    %v544 = vpop.permute.xlu0 %543
    %v546 = vmul.f32 %v539, %v544
    %548 = vrot.lane.b32.xlu0 %v546, 32
    %v549 = vpop.permute.xlu0 %548
    %v551 = vadd.f32 %v541, %v549
    %v552 = vtanh.pop %v551
    %554 = vrot.lane.b32.xlu0 %v552, 64
    %v555 = vpop.permute.xlu0 %554
    %v557 = vmul.f32 %v539, %v555
    %s558 = scalar_lea.vmem [#allocation2], 48
    %v559 = vld [vmem:[%s558] sm:$0xff]
    %561 = vrot.lane.b32.xlu0 %v557, 32
    %v562 = vpop.permute.xlu0 %561
    %v563 = vsel %vm167, %v562, 0
    %565 = vmatpush.msra.mxu0 0.0
    %566 = vmatpush.msra.mxu0 0.0
    %567 = vmatpush.msra.mxu0 0.0
    %568 = vmatpush.msra.mxu0 0.0
    %569 = vmatpush.msra.mxu0 0.0
    %570 = vmatpush.msra.mxu0 0.0
    %571 = vmatpush.msra.mxu0 0.0
    %572 = vmatpush.msra.mxu0 0.0
    %573 = vmatpush.msra.mxu0 0.0
    %574 = vmatpush.msra.mxu0 0.0
    %575 = vmatpush.msra.mxu0 0.0
    %576 = vmatpush.msra.mxu0 0.0
    %577 = vmatpush.msra.mxu0 %v163
    %578 = vmatpush.msra.mxu0 %v162
    %579 = vmatpush.msra.mxu0 %v161
    %580 = vmatpush.msra.mxu0 %v160
    %581 = vmatmul.f32.gmra.mxu0 %v563
    %v582 = vpop.f32.mrf.mxu0
    %v583 = vadd.f32 0.0, %v582
    %584 = vdwg.mxu0
    %v585 = vadd.f32 %v559, %v583
    %v586 = vxor.u32 %v585, 2147483648
    %v587 = vmul.f32 %v586, 1.442695
    %v588 = vpow.pop %v587
    %v589 = vadd.f32 %v588, 1.0
    %v590 = vrcp.pop %v589
    %v591 = vmul.f32 %v589, %v590
    %v592 = vsub.f32 1.0, %v591
    %v593 = vmul.f32 %v590, %v592
    %v594 = vadd.f32 %v590, %v593
    %vm595 = vweird.f32 %v589
    %vm596 = vweird.f32 %v590
    %vm597 = vmor %vm595, %vm596
    %v598 = vsel %vm597, %v590, %v594
    %v599 = vand.u32 2147483647, %v589
    %vm600 = vcmp.eq.f32.partialorder %v599, 8.507059e+37
    %v601 = vand.u32 %v589, 2147483648
    %v602 = vor.u32 1.1754944e-38, %v601
    %v603 = vsel %vm600, %v602, %v598
    %v604 = vmul.f32 1.0, %v603
    %v605 = vtanh.pop %v585
    %v606 = vmul.f32 %v604, %v551
    %608 = vrot.lane.b32.xlu0 %v605, 64
    %v609 = vpop.permute.xlu0 %608
    %v611 = vmul.f32 %v604, %v609
    %613 = vrot.lane.b32.xlu0 %v611, 32
    %v614 = vpop.permute.xlu0 %613
    %v616 = vadd.f32 %v606, %v614
    %v617 = vtanh.pop %v616
    %619 = vrot.lane.b32.xlu0 %v617, 64
    %v620 = vpop.permute.xlu0 %619
    %v622 = vmul.f32 %v604, %v620
    %s623 = scalar_lea.vmem [#allocation2], 56
    %v624 = vld [vmem:[%s623] sm:$0xff]
    %626 = vrot.lane.b32.xlu0 %v622, 32
    %v627 = vpop.permute.xlu0 %626
    %v628 = vsel %vm167, %v627, 0
    %630 = vmatpush.msra.mxu0 0.0
    %631 = vmatpush.msra.mxu0 0.0
    %632 = vmatpush.msra.mxu0 0.0
    %633 = vmatpush.msra.mxu0 0.0
    %634 = vmatpush.msra.mxu0 0.0
    %635 = vmatpush.msra.mxu0 0.0
    %636 = vmatpush.msra.mxu0 0.0
    %637 = vmatpush.msra.mxu0 0.0
    %638 = vmatpush.msra.mxu0 0.0
    %639 = vmatpush.msra.mxu0 0.0
    %640 = vmatpush.msra.mxu0 0.0
    %641 = vmatpush.msra.mxu0 0.0
    %642 = vmatpush.msra.mxu0 %v163
    %643 = vmatpush.msra.mxu0 %v162
    %644 = vmatpush.msra.mxu0 %v161
    %645 = vmatpush.msra.mxu0 %v160
    %646 = vmatmul.f32.gmra.mxu0 %v628
    %v647 = vpop.f32.mrf.mxu0
    %v648 = vadd.f32 0.0, %v647
    %649 = vdwg.mxu0
    %v650 = vadd.f32 %v624, %v648
    %v651 = vxor.u32 %v650, 2147483648
    %v652 = vmul.f32 %v651, 1.442695
    %v653 = vpow.pop %v652
    %v654 = vadd.f32 %v653, 1.0
    %v655 = vrcp.pop %v654
    %v656 = vmul.f32 %v654, %v655
    %v657 = vsub.f32 1.0, %v656
    %v658 = vmul.f32 %v655, %v657
    %v659 = vadd.f32 %v655, %v658
    %vm660 = vweird.f32 %v654
    %vm661 = vweird.f32 %v655
    %vm662 = vmor %vm660, %vm661
    %v663 = vsel %vm662, %v655, %v659
    %v664 = vand.u32 2147483647, %v654
    %vm665 = vcmp.eq.f32.partialorder %v664, 8.507059e+37
    %v666 = vand.u32 %v654, 2147483648
    %v667 = vor.u32 1.1754944e-38, %v666
    %v668 = vsel %vm665, %v667, %v663
    %v669 = vmul.f32 1.0, %v668
    %v670 = vtanh.pop %v650
    %v671 = vmul.f32 %v669, %v616
    %673 = vrot.lane.b32.xlu0 %v670, 64
    %v674 = vpop.permute.xlu0 %673
    %v676 = vmul.f32 %v669, %v674
    %678 = vrot.lane.b32.xlu0 %v676, 32
    %v679 = vpop.permute.xlu0 %678
    %v681 = vadd.f32 %v671, %v679
    %v682 = vtanh.pop %v681
    %684 = vrot.lane.b32.xlu0 %v682, 64
    %v685 = vpop.permute.xlu0 %684
    %v687 = vmul.f32 %v669, %v685
    %689 = vrot.lane.b32.xlu0 %v687, 32
    %v690 = vpop.permute.xlu0 %689
    %692 = vst.msk [vmem:[#allocation3] sm:$0xff] %vm167, %v690
    %694 = vrot.lane.b32.xlu0 %v681, 96
    %v695 = vpop.permute.xlu0 %694
    %697 = vst.msk [vmem:[#allocation4] sm:$0xff] %vm167, %v695
    // Predicated region
    $region38: #{tpu_custom_call.1} parent=1 // pred_check
      %p698 = pneg %p57
    $region39: #{tpu_custom_call.1} parent=1 // pred_check_branch
      %700 = sbr.rel (%p698) target = $region41
    $region40: #{tpu_custom_call.1} parent=1 // pred_region
      %v701 = vld [vmem:[%s4] sm:$0xff]
      %v702 = vld [vmem:[%s4 + $0x8] sm:$0xff]
      %v703 = vld [vmem:[%s4 + $0x10] sm:$0xff]
      %v704 = vld [vmem:[%s4 + $0x18] sm:$0xff]
      %v705 = vld [vmem:[#allocation5] sm:$0x1]
      %v707 = vperm.slane %v705, 0
      %v709 = vsel %vm167, %v690, 0
      %711 = vmatpush.msra.mxu0 0.0
      %712 = vmatpush.msra.mxu0 0.0
      %713 = vmatpush.msra.mxu0 0.0
      %714 = vmatpush.msra.mxu0 0.0
      %715 = vmatpush.msra.mxu0 0.0
      %716 = vmatpush.msra.mxu0 0.0
      %717 = vmatpush.msra.mxu0 0.0
      %718 = vmatpush.msra.mxu0 0.0
      %719 = vmatpush.msra.mxu0 0.0
      %720 = vmatpush.msra.mxu0 0.0
      %721 = vmatpush.msra.mxu0 0.0
      %722 = vmatpush.msra.mxu0 0.0
      %723 = vmatpush.msra.mxu0 %v704
      %724 = vmatpush.msra.mxu0 %v703
      %725 = vmatpush.msra.mxu0 %v702
      %726 = vmatpush.msra.mxu0 %v701
      %727 = vmatmul.f32.gmra.mxu0 %v709
      %v728 = vpop.f32.mrf.mxu0
      %v729 = vadd.f32 %v707, %v728
      %730 = vdwg.mxu0
      %vm731 = vcmask 7168
      %732 = vst.msk [vmem:[%s6] sm:$0xff] %vm731, %v729
    $region41: #{tpu_custom_call.1} parent=1 // pred_fallthru
      _
    // Predicated region
    $region42: #{tpu_custom_call.1} parent=1 // pred_check
      _
    $region43: #{tpu_custom_call.1} parent=1 // pred_check_branch
      %734 = sbr.rel (0) target = $region45
    $region44: #{tpu_custom_call.1} parent=1 // pred_region
      _
    $region45: #{tpu_custom_call.1} parent=1 // pred_fallthru
      _
    // Predicated region
    $region46: #{tpu_custom_call.1} parent=1 // pred_check
      _
    $region47: #{tpu_custom_call.1} parent=1 // pred_check_branch
      %736 = sbr.rel (0) target = $region49
    $region48: #{tpu_custom_call.1} parent=1 // pred_region
      _
    $region49: #{tpu_custom_call.1} parent=1 // pred_fallthru
      _
    %737 = vsyncpa [#allocation7], 1
    %738 = vsyncpa [#allocation9], 1

</llo_original>
